<compile_context>
chip_gen: v7x
topology: tpu7x:2x2x1
jax: 0.10.0
libtpu: 0.0.40
codegen_flags: <defaults>
</compile_context>

<pallas_src>
import jax
import jax.numpy as jnp
from jax.experimental import pallas as pl
from jax.experimental.pallas import tpu as pltpu  # noqa: F401 (no scratch needed anymore)

# ----------------------------- configuration -------------------------------
SEQ_LEN = 32
PRED_LEN = 8
D_MODEL = 32
N_HEADS = 4
D_FF = 64
PATCH_LEN = 16
STRIDE = 8
PATCH_NUM = (SEQ_LEN - PATCH_LEN) // STRIDE + 2     # = 4
B = 2
C = 4                                               # enc_in channels
BC = B * C                                          # = 8 independent series
ROWS = BC * PATCH_NUM                               # = 32 patch rows
HEAD_DIM = D_MODEL // N_HEADS                       # = 8
SCALE = 1.0 / (HEAD_DIM ** 0.5)
LN_EPS = 1e-5
VEC_WIDTH = 128
OUT_WIDTH = 128                                     # lane-dense kernel output

# ---- packed constant slab layout: one (SLAB_ROWS, 128) f32 array ----------
W_IN_R0 = 0                                # (PATCH_LEN, D_MODEL)
W_QKV_R0 = W_IN_R0 + PATCH_LEN             # (D_MODEL, 3*D_MODEL)
W_O_R0 = W_QKV_R0 + D_MODEL                # (D_MODEL, D_MODEL)
W_1_R0 = W_O_R0 + D_MODEL                  # (D_MODEL, D_FF)
W_2_R0 = W_1_R0 + D_MODEL                  # (D_FF, D_MODEL)
W_OUT_R0 = W_2_R0 + D_FF                   # (PATCH_NUM*D_MODEL, 128) lane-padded
VEC_R0 = W_OUT_R0 + PATCH_NUM * D_MODEL    # bias / LayerNorm vector rows
VEC_ROWS = 16
SLAB_ROWS = VEC_R0 + VEC_ROWS              # = 320

# vector-row offsets within the vec block
R_B_IN, R_B_QKV, R_B_O, R_B_1, R_B_2 = 0, 1, 2, 3, 4
R_G1, R_BE1, R_G2, R_BE2, R_GF, R_BEF, R_B_OUT = 5, 6, 7, 8, 9, 10, 11


# ------------------------------ shared helper -------------------------------
def _layernorm(x, g, b):
    mu = jnp.mean(x, axis=-1, keepdims=True)
    d = x - mu
    var = jnp.mean(d * d, axis=-1, keepdims=True)
    return d * jax.lax.rsqrt(var + LN_EPS) * g + b


# ------------------------------ Pallas kernel ------------------------------
def pattn_kernel(x_ref, slab_ref, o_ref):
    f32 = jnp.float32
    bc = x_ref.shape[0]                 # number of independent series (B*C)
    rows = bc * PATCH_NUM               # patch rows, patch-major (row = m*bc + s)

    # -------- packed constants (static slices of the single slab input) -----
    w_in = slab_ref[W_IN_R0:W_IN_R0 + PATCH_LEN, :D_MODEL]
    w_qkv = slab_ref[W_QKV_R0:W_QKV_R0 + D_MODEL, :3 * D_MODEL]
    w_o = slab_ref[W_O_R0:W_O_R0 + D_MODEL, :D_MODEL]
    w_1 = slab_ref[W_1_R0:W_1_R0 + D_MODEL, :D_FF]
    w_2 = slab_ref[W_2_R0:W_2_R0 + D_FF, :D_MODEL]
    w_out = slab_ref[W_OUT_R0:W_OUT_R0 + PATCH_NUM * D_MODEL, :]   # lane-dense
    vecs = slab_ref[VEC_R0:VEC_R0 + VEC_ROWS, :]

    b_in = vecs[R_B_IN:R_B_IN + 1, :D_MODEL]
    b_qkv = vecs[R_B_QKV:R_B_QKV + 1, :3 * D_MODEL]
    b_o = vecs[R_B_O:R_B_O + 1, :D_MODEL]
    b_1 = vecs[R_B_1:R_B_1 + 1, :D_FF]
    b_2 = vecs[R_B_2:R_B_2 + 1, :D_MODEL]
    g1 = vecs[R_G1:R_G1 + 1, :D_MODEL]
    be1 = vecs[R_BE1:R_BE1 + 1, :D_MODEL]
    g2 = vecs[R_G2:R_G2 + 1, :D_MODEL]
    be2 = vecs[R_BE2:R_BE2 + 1, :D_MODEL]
    gf = vecs[R_GF:R_GF + 1, :D_MODEL]
    bef = vecs[R_BEF:R_BEF + 1, :D_MODEL]
    b_out = vecs[R_B_OUT:R_B_OUT + 1, :]            # 128-lane, zero padded

    # -------- instance normalisation over the time axis (per series) --------
    x = x_ref[...]                                  # (bc, SEQ_LEN) raw series
    mu = jnp.mean(x, axis=-1, keepdims=True)
    xc = x - mu
    stdev = jnp.sqrt(jnp.mean(xc * xc, axis=-1, keepdims=True) + 1e-5)
    xn = xc / stdev

    # -------- replication pad + unfold (patching), all in-register ----------
    pad = jnp.broadcast_to(xn[:, SEQ_LEN - 1:SEQ_LEN], (bc, STRIDE))
    xp = jnp.concatenate([xn, pad], axis=-1)        # (bc, SEQ_LEN + STRIDE)
    x_rows = jnp.concatenate(
        [xp[:, m * STRIDE:m * STRIDE + PATCH_LEN] for m in range(PATCH_NUM)],
        axis=0)                                     # (rows, PATCH_LEN), patch-major

    # -------- in_layer + fused QKV projection -------------------------------
    h = jnp.dot(x_rows, w_in, preferred_element_type=f32) + b_in       # (rows, D)
    qkv = jnp.dot(h, w_qkv, preferred_element_type=f32) + b_qkv        # (rows, 3D)
    q = qkv[:, :D_MODEL]
    k = qkv[:, D_MODEL:2 * D_MODEL]
    v = qkv[:, 2 * D_MODEL:3 * D_MODEL]

    # block-diagonal "same series" additive mask; series of row r is r % bc.
    if bc & (bc - 1) == 0:                          # power of two -> cheap AND
        r_sid = jax.lax.broadcasted_iota(jnp.int32, (rows, rows), 0) & (bc - 1)
        c_sid = jax.lax.broadcasted_iota(jnp.int32, (rows, rows), 1) & (bc - 1)
    else:
        r_sid = jax.lax.broadcasted_iota(jnp.int32, (rows, rows), 0) % bc
        c_sid = jax.lax.broadcasted_iota(jnp.int32, (rows, rows), 1) % bc
    mask_add = jnp.where(r_sid == c_sid, 0.0, -1e30).astype(f32)

    # -------- multi-head self-attention, head outputs kept in registers -----
    head_outs = []
    for hh in range(N_HEADS):
        sl = slice(hh * HEAD_DIM, (hh + 1) * HEAD_DIM)
        qh, kh, vh = q[:, sl], k[:, sl], v[:, sl]
        s = jax.lax.dot_general(qh, kh, (((1,), (1,)), ((), ())),
                                preferred_element_type=f32) * SCALE    # (rows, rows)
        s = s + mask_add
        s = s - jnp.max(s, axis=-1, keepdims=True)
        p = jnp.exp(s)
        inv_den = pl.reciprocal(jnp.sum(p, axis=-1, keepdims=True), approx=True)
        head_outs.append(jnp.dot(p, vh, preferred_element_type=f32) * inv_den)
    attn = jnp.concatenate(head_outs, axis=1)                          # (rows, D)
    attn_out = jnp.dot(attn, w_o, preferred_element_type=f32) + b_o

    # -------- EncoderLayer: residual + FFN (Conv1d k=1 == Linear) -----------
    x1 = _layernorm(h + attn_out, g1, be1)
    y = jnp.dot(x1, w_1, preferred_element_type=f32) + b_1
    y = jnp.maximum(y, 0.0)                          # activation = relu
    y = jnp.dot(y, w_2, preferred_element_type=f32) + b_2
    x2 = _layernorm(x1 + y, g2, be2)
    xf = _layernorm(x2, gf, bef)                     # (rows, D)

    # -------- out_layer: per-series flatten (in registers, lane-dense) ------
    # patch m of every series is the contiguous row block [m*bc, (m+1)*bc);
    # lane-concatenating those blocks gives (bc, patch_num*d_model) = (8, 128).
    flat = jnp.concatenate(
        [xf[m * bc:(m + 1) * bc, :] for m in range(PATCH_NUM)], axis=1)
    out = jnp.dot(flat, w_out, preferred_element_type=f32) + b_out     # (bc, 128)

    # instance de-normalisation fused into the (lane-dense) output write
    o_ref[...] = out * stdev + mu


# ------------------------------ param packing -------------------------------
def _pack_vecs(p):
    def row(v):
        v = jnp.asarray(v, jnp.float32).reshape(-1)
        return jnp.pad(v, (0, VEC_WIDTH - v.shape[0]))

    rows = [
        row(p["b_in"]),
        row(jnp.concatenate([p["bq"].reshape(-1), p["bk"].reshape(-1),
                             p["bv"].reshape(-1)])),
        row(p["bo"]), row(p["b1"]), row(p["b2"]),
        row(p["g1"]), row(p["be1"]),
        row(p["g2"]), row(p["be2"]),
        row(p["gf"]), row(p["bef"]),
        row(p["b_out"]),
    ]
    rows += [jnp.zeros((VEC_WIDTH,), jnp.float32)] * (VEC_ROWS - len(rows))
    return jnp.stack(rows)                           # (VEC_ROWS, 128)


def pack_slab(p):
    """Pack all weights + vectors into one (SLAB_ROWS, 128) lane-padded slab."""
    def lanepad(a):
        a = jnp.asarray(a, jnp.float32)
        return jnp.pad(a, ((0, 0), (0, VEC_WIDTH - a.shape[1])))

    wqkv = jnp.concatenate([p["wq"], p["wk"], p["wv"]], axis=1)       # (D, 3D)
    slab = jnp.concatenate(
        [lanepad(p["w_in"]), lanepad(wqkv), lanepad(p["wo"]),
         lanepad(p["w1"]), lanepad(p["w2"]), lanepad(p["w_out"]),
         _pack_vecs(p)], axis=0)
    assert slab.shape == (SLAB_ROWS, VEC_WIDTH)
    return slab


# ------------------------ full model forward (wrapper) ----------------------
@jax.jit
def _forward_jit(x_enc, slab):
    # (B, L, C) -> (B*C, L); normalisation / patching / denorm happen in-kernel.
    x_series = jnp.transpose(x_enc, (0, 2, 1)).reshape(B * C, SEQ_LEN)
    out_full = pl.pallas_call(
        pattn_kernel,
        out_shape=jax.ShapeDtypeStruct((B * C, OUT_WIDTH), jnp.float32),
    )(x_series, slab)
    dec = out_full[:, :PRED_LEN].reshape(B, C, PRED_LEN)
    return jnp.transpose(dec, (0, 2, 1))             # (B, pred_len, C)


def pattn_forward(x_enc, x_mark_enc, x_dec, x_mark_dec, slab):
    del x_mark_enc, x_dec, x_mark_dec                # unused, as in torch
    return _forward_jit(x_enc, slab), 0


# ----------------------- pure-JAX reference (for check) ---------------------
def _preprocess(x_enc):
    means = jnp.mean(x_enc, axis=1, keepdims=True)                   # (B,1,C)
    xc = x_enc - means
    stdev = jnp.sqrt(jnp.var(xc, axis=1, keepdims=True) + 1e-5)      # (B,1,C)
    xn = xc / stdev
    x = jnp.transpose(xn, (0, 2, 1))                                 # (B,C,L)
    x = jnp.concatenate([x, jnp.repeat(x[..., -1:], STRIDE, axis=-1)], axis=-1)
    starts = jnp.arange(PATCH_NUM) * STRIDE
    idx = starts[:, None] + jnp.arange(PATCH_LEN)[None, :]
    x_patch = x[:, :, idx]                                           # (B,C,M,P)
    return x_patch.reshape(B * C, PATCH_NUM, PATCH_LEN), means, stdev


def _postprocess(dec, means, stdev):
    dec = dec.reshape(B, C, PRED_LEN).transpose(0, 2, 1)             # (B,pred,C)
    return dec * stdev[:, 0, :][:, None, :] + means[:, 0, :][:, None, :]


def _ref_encoder(x_patch, p):
    h = x_patch @ p["w_in"] + p["b_in"]                              # (BC, M, D)
    q = h @ p["wq"] + p["bq"]
    k = h @ p["wk"] + p["bk"]
    v = h @ p["wv"] + p["bv"]
    bc = h.shape[0]
    qh = q.reshape(bc, PATCH_NUM, N_HEADS, HEAD_DIM)
    kh = k.reshape(bc, PATCH_NUM, N_HEADS, HEAD_DIM)
    vh = v.reshape(bc, PATCH_NUM, N_HEADS, HEAD_DIM)
    s = jnp.einsum("bmhe,bnhe->bhmn", qh, kh) * SCALE
    a = jax.nn.softmax(s, axis=-1)
    o = jnp.einsum("bhmn,bnhe->bmhe", a, vh).reshape(bc, PATCH_NUM, D_MODEL)
    attn_out = o @ p["wo"] + p["bo"]
    x1 = _layernorm(h + attn_out, p["g1"], p["be1"])
    y = jnp.maximum(x1 @ p["w1"] + p["b1"], 0.0)
    y = y @ p["w2"] + p["b2"]
    x2 = _layernorm(x1 + y, p["g2"], p["be2"])
    xf = _layernorm(x2, p["gf"], p["bef"])
    flat = xf.reshape(bc, PATCH_NUM * D_MODEL)
    return flat @ p["w_out"] + p["b_out"]


def pattn_forward_ref(x_enc, params):
    x_patch, means, stdev = _preprocess(x_enc)
    dec = _ref_encoder(x_patch, params)
    return _postprocess(dec, means, stdev)


# ------------------------------ parameter init ------------------------------
def init_params(key):
    def linear(k, fan_in, fan_out):
        bound = 1.0 / (fan_in ** 0.5)
        kw, kb = jax.random.split(k)
        w = jax.random.uniform(kw, (fan_in, fan_out), jnp.float32, -bound, bound)
        b = jax.random.uniform(kb, (1, fan_out), jnp.float32, -bound, bound)
        return w, b

    keys = jax.random.split(key, 8)
    p = {}
    p["w_in"], p["b_in"] = linear(keys[0], PATCH_LEN, D_MODEL)
    p["wq"], p["bq"] = linear(keys[1], D_MODEL, D_MODEL)
    p["wk"], p["bk"] = linear(keys[2], D_MODEL, D_MODEL)
    p["wv"], p["bv"] = linear(keys[3], D_MODEL, D_MODEL)
    p["wo"], p["bo"] = linear(keys[4], D_MODEL, D_MODEL)
    p["w1"], p["b1"] = linear(keys[5], D_MODEL, D_FF)
    p["w2"], p["b2"] = linear(keys[6], D_FF, D_MODEL)
    p["w_out"], p["b_out"] = linear(keys[7], D_MODEL * PATCH_NUM, PRED_LEN)
    for name in ("g1", "g2", "gf"):
        p[name] = jnp.ones((1, D_MODEL), jnp.float32)
    for name in ("be1", "be2", "bef"):
        p[name] = jnp.zeros((1, D_MODEL), jnp.float32)
    return p


# ----------------------------------- main -----------------------------------
if __name__ == "__main__":
    key = jax.random.PRNGKey(0)
    k_x, k_p = jax.random.split(key)

    x_enc = jax.random.normal(k_x, (B, SEQ_LEN, C), jnp.float32)
    x_mark_enc = jnp.zeros((B, SEQ_LEN, 4), jnp.float32)    # unused by forward
    x_dec = jnp.zeros((B, PRED_LEN, C), jnp.float32)        # unused by forward
    x_mark_dec = jnp.zeros((B, PRED_LEN, 4), jnp.float32)   # unused by forward

    params = init_params(k_p)
    slab = jax.block_until_ready(pack_slab(params))         # pack weights once

    out, _ = pattn_forward(x_enc, x_mark_enc, x_dec, x_mark_dec, slab)
    out = jax.block_until_ready(out)

    ref = jax.block_until_ready(pattn_forward_ref(x_enc, params))
    assert out.shape == (B, PRED_LEN, C)
    assert jnp.allclose(out, ref, atol=2e-3, rtol=2e-3), (
        f"max abs err {jnp.max(jnp.abs(out - ref))}")

    print("KERNEL_OK")
</pallas_src>

<mosaic_0001>
module attributes {stable_mosaic.version = 11 : i64} {
  func.func @pattn_kernel(%arg0: memref<8x32xf32, #tpu.memory_space<vmem>>, %arg1: memref<320x128xf32, #tpu.memory_space<vmem>>, %arg2: memref<8x128xf32, #tpu.memory_space<vmem>>) attributes {dimension_semantics = [], scalar_prefetch = 0 : i64, scratch_operands = 0 : i64, tpu.core_type = #tpu.core_type<tc>} {
    %c0 = arith.constant 0 : index
    %c0_0 = arith.constant 0 : index
    %0 = vector.load %arg1[%c0, %c0_0] : memref<320x128xf32, #tpu.memory_space<vmem>>, vector<16x32xf32>
    %c16 = arith.constant 16 : index
    %c0_1 = arith.constant 0 : index
    %1 = vector.load %arg1[%c16, %c0_1] : memref<320x128xf32, #tpu.memory_space<vmem>>, vector<32x96xf32>
    %c48 = arith.constant 48 : index
    %c0_2 = arith.constant 0 : index
    %2 = vector.load %arg1[%c48, %c0_2] : memref<320x128xf32, #tpu.memory_space<vmem>>, vector<32x32xf32>
    %c80 = arith.constant 80 : index
    %c0_3 = arith.constant 0 : index
    %3 = vector.load %arg1[%c80, %c0_3] : memref<320x128xf32, #tpu.memory_space<vmem>>, vector<32x64xf32>
    %c112 = arith.constant 112 : index
    %c0_4 = arith.constant 0 : index
    %4 = vector.load %arg1[%c112, %c0_4] : memref<320x128xf32, #tpu.memory_space<vmem>>, vector<64x32xf32>
    %c176 = arith.constant 176 : index
    %c0_5 = arith.constant 0 : index
    %5 = vector.load %arg1[%c176, %c0_5] : memref<320x128xf32, #tpu.memory_space<vmem>>, vector<128x128xf32>
    %c304 = arith.constant 304 : index
    %c0_6 = arith.constant 0 : index
    %6 = vector.load %arg1[%c304, %c0_6] : memref<320x128xf32, #tpu.memory_space<vmem>>, vector<16x128xf32>
    %7 = vector.extract_strided_slice %6 {offsets = [0, 0], sizes = [1, 32], strides = [1, 1]} : vector<16x128xf32> to vector<1x32xf32>
    %8 = vector.extract_strided_slice %6 {offsets = [1, 0], sizes = [1, 96], strides = [1, 1]} : vector<16x128xf32> to vector<1x96xf32>
    %9 = vector.extract_strided_slice %6 {offsets = [2, 0], sizes = [1, 32], strides = [1, 1]} : vector<16x128xf32> to vector<1x32xf32>
    %10 = vector.extract_strided_slice %6 {offsets = [3, 0], sizes = [1, 64], strides = [1, 1]} : vector<16x128xf32> to vector<1x64xf32>
    %11 = vector.extract_strided_slice %6 {offsets = [4, 0], sizes = [1, 32], strides = [1, 1]} : vector<16x128xf32> to vector<1x32xf32>
    %12 = vector.extract_strided_slice %6 {offsets = [5, 0], sizes = [1, 32], strides = [1, 1]} : vector<16x128xf32> to vector<1x32xf32>
    %13 = vector.extract_strided_slice %6 {offsets = [6, 0], sizes = [1, 32], strides = [1, 1]} : vector<16x128xf32> to vector<1x32xf32>
    %14 = vector.extract_strided_slice %6 {offsets = [7, 0], sizes = [1, 32], strides = [1, 1]} : vector<16x128xf32> to vector<1x32xf32>
    %15 = vector.extract_strided_slice %6 {offsets = [8, 0], sizes = [1, 32], strides = [1, 1]} : vector<16x128xf32> to vector<1x32xf32>
    %16 = vector.extract_strided_slice %6 {offsets = [9, 0], sizes = [1, 32], strides = [1, 1]} : vector<16x128xf32> to vector<1x32xf32>
    %17 = vector.extract_strided_slice %6 {offsets = [10, 0], sizes = [1, 32], strides = [1, 1]} : vector<16x128xf32> to vector<1x32xf32>
    %18 = vector.extract_strided_slice %6 {offsets = [11, 0], sizes = [1, 128], strides = [1, 1]} : vector<16x128xf32> to vector<1x128xf32>
    %c0_7 = arith.constant 0 : index
    %c0_8 = arith.constant 0 : index
    %19 = vector.load %arg0[%c0_7, %c0_8] : memref<8x32xf32, #tpu.memory_space<vmem>>, vector<8x32xf32>
    %cst = arith.constant dense<0.000000e+00> : vector<8xf32>
    %20 = vector.multi_reduction <add>, %19, %cst [1] : vector<8x32xf32> to vector<8xf32>
    %21 = vector.shape_cast %20 : vector<8xf32> to vector<8x1xf32>
    %cst_9 = arith.constant 3.200000e+01 : f32
    %22 = vector.broadcast %cst_9 : f32 to vector<8x1xf32>
    %23 = arith.divf %21, %22 : vector<8x1xf32>
    %24 = vector.broadcast %23 : vector<8x1xf32> to vector<8x32xf32>
    %25 = arith.subf %19, %24 : vector<8x32xf32>
    %26 = arith.mulf %25, %25 : vector<8x32xf32>
    %cst_10 = arith.constant dense<0.000000e+00> : vector<8xf32>
    %27 = vector.multi_reduction <add>, %26, %cst_10 [1] : vector<8x32xf32> to vector<8xf32>
    %28 = vector.shape_cast %27 : vector<8xf32> to vector<8x1xf32>
    %cst_11 = arith.constant 3.200000e+01 : f32
    %29 = vector.broadcast %cst_11 : f32 to vector<8x1xf32>
    %30 = arith.divf %28, %29 : vector<8x1xf32>
    %cst_12 = arith.constant 9.99999974E-6 : f32
    %31 = vector.broadcast %cst_12 : f32 to vector<8x1xf32>
    %32 = arith.addf %30, %31 : vector<8x1xf32>
    %33 = math.sqrt %32 : vector<8x1xf32>
    %34 = vector.broadcast %33 : vector<8x1xf32> to vector<8x32xf32>
    %35 = arith.divf %25, %34 : vector<8x32xf32>
    %36 = vector.extract_strided_slice %35 {offsets = [0, 31], sizes = [8, 1], strides = [1, 1]} : vector<8x32xf32> to vector<8x1xf32>
    %37 = vector.shape_cast %36 : vector<8x1xf32> to vector<8x1xf32>
    %38 = vector.broadcast %37 : vector<8x1xf32> to vector<8x8xf32>
    %39 = tpu.concatenate %35, %38 in 1 : vector<8x32xf32>, vector<8x8xf32> -> vector<8x40xf32>
    %40 = vector.extract_strided_slice %39 {offsets = [0, 0], sizes = [8, 16], strides = [1, 1]} : vector<8x40xf32> to vector<8x16xf32>
    %41 = vector.extract_strided_slice %39 {offsets = [0, 8], sizes = [8, 16], strides = [1, 1]} : vector<8x40xf32> to vector<8x16xf32>
    %42 = vector.extract_strided_slice %39 {offsets = [0, 16], sizes = [8, 16], strides = [1, 1]} : vector<8x40xf32> to vector<8x16xf32>
    %43 = vector.extract_strided_slice %39 {offsets = [0, 24], sizes = [8, 16], strides = [1, 1]} : vector<8x40xf32> to vector<8x16xf32>
    %44 = tpu.concatenate %40, %41, %42, %43 in 0 : vector<8x16xf32>, vector<8x16xf32>, vector<8x16xf32>, vector<8x16xf32> -> vector<32x16xf32>
    %cst_13 = arith.constant dense<0.000000e+00> : vector<32x32xf32>
    %45 = tpu.matmul %44, %0, %cst_13 {dimension_numbers = #tpu.dot_dimension_numbers<[1], [0], [0], [1], [0, 0, 1, 1], [], []>} : vector<32x16xf32>, vector<16x32xf32>, vector<32x32xf32> -> vector<32x32xf32>
    %46 = vector.broadcast %7 : vector<1x32xf32> to vector<32x32xf32>
    %47 = arith.addf %45, %46 : vector<32x32xf32>
    %cst_14 = arith.constant dense<0.000000e+00> : vector<32x96xf32>
    %48 = tpu.matmul %47, %1, %cst_14 {dimension_numbers = #tpu.dot_dimension_numbers<[1], [0], [0], [1], [0, 0, 1, 1], [], []>} : vector<32x32xf32>, vector<32x96xf32>, vector<32x96xf32> -> vector<32x96xf32>
    %49 = vector.broadcast %8 : vector<1x96xf32> to vector<32x96xf32>
    %50 = arith.addf %48, %49 : vector<32x96xf32>
    %51 = vector.extract_strided_slice %50 {offsets = [0, 0], sizes = [32, 32], strides = [1, 1]} : vector<32x96xf32> to vector<32x32xf32>
    %52 = vector.extract_strided_slice %50 {offsets = [0, 32], sizes = [32, 32], strides = [1, 1]} : vector<32x96xf32> to vector<32x32xf32>
    %53 = vector.extract_strided_slice %50 {offsets = [0, 64], sizes = [32, 32], strides = [1, 1]} : vector<32x96xf32> to vector<32x32xf32>
    %54 = tpu.iota {dimensions = array<i32: 0>} : vector<32x32xi32>
    %c7_i32 = arith.constant 7 : i32
    %55 = vector.broadcast %c7_i32 : i32 to vector<32x32xi32>
    %56 = arith.andi %54, %55 : vector<32x32xi32>
    %57 = tpu.iota {dimensions = array<i32: 1>} : vector<32x32xi32>
    %c7_i32_15 = arith.constant 7 : i32
    %58 = vector.broadcast %c7_i32_15 : i32 to vector<32x32xi32>
    %59 = arith.andi %57, %58 : vector<32x32xi32>
    %60 = arith.cmpi eq, %56, %59 : vector<32x32xi32>
    %cst_16 = arith.constant 0.000000e+00 : f32
    %cst_17 = arith.constant -1.000000e+30 : f32
    %61 = vector.broadcast %cst_16 : f32 to vector<32x32xf32>
    %62 = vector.broadcast %cst_17 : f32 to vector<32x32xf32>
    %63 = arith.select %60, %61, %62 : vector<32x32xi1>, vector<32x32xf32>
    %64 = vector.extract_strided_slice %51 {offsets = [0, 0], sizes = [32, 8], strides = [1, 1]} : vector<32x32xf32> to vector<32x8xf32>
    %65 = vector.extract_strided_slice %52 {offsets = [0, 0], sizes = [32, 8], strides = [1, 1]} : vector<32x32xf32> to vector<32x8xf32>
    %66 = vector.extract_strided_slice %53 {offsets = [0, 0], sizes = [32, 8], strides = [1, 1]} : vector<32x32xf32> to vector<32x8xf32>
    %cst_18 = arith.constant dense<0.000000e+00> : vector<32x32xf32>
    %67 = tpu.matmul %64, %65, %cst_18 {dimension_numbers = #tpu.dot_dimension_numbers<[1], [1], [0], [0], [0, 0, 1, 0], [], []>} : vector<32x8xf32>, vector<32x8xf32>, vector<32x32xf32> -> vector<32x32xf32>
    %cst_19 = arith.constant 0.353553385 : f32
    %68 = vector.broadcast %cst_19 : f32 to vector<32x32xf32>
    %69 = arith.mulf %67, %68 : vector<32x32xf32>
    %70 = arith.addf %69, %63 : vector<32x32xf32>
    %cst_20 = arith.constant dense<0xFF800000> : vector<32xf32>
    %71 = vector.multi_reduction <maximumf>, %70, %cst_20 [1] : vector<32x32xf32> to vector<32xf32>
    %72 = vector.shape_cast %71 : vector<32xf32> to vector<32x1xf32>
    %73 = vector.broadcast %72 : vector<32x1xf32> to vector<32x32xf32>
    %74 = arith.subf %70, %73 : vector<32x32xf32>
    %75 = math.exp %74 : vector<32x32xf32>
    %cst_21 = arith.constant dense<0.000000e+00> : vector<32xf32>
    %76 = vector.multi_reduction <add>, %75, %cst_21 [1] : vector<32x32xf32> to vector<32xf32>
    %77 = vector.shape_cast %76 : vector<32xf32> to vector<32x1xf32>
    %78 = tpu.reciprocal %77 {approx = true} : vector<32x1xf32> -> vector<32x1xf32>
    %cst_22 = arith.constant dense<0.000000e+00> : vector<32x8xf32>
    %79 = tpu.matmul %75, %66, %cst_22 {dimension_numbers = #tpu.dot_dimension_numbers<[1], [0], [0], [1], [0, 0, 1, 1], [], []>} : vector<32x32xf32>, vector<32x8xf32>, vector<32x8xf32> -> vector<32x8xf32>
    %80 = vector.broadcast %78 : vector<32x1xf32> to vector<32x8xf32>
    %81 = arith.mulf %79, %80 : vector<32x8xf32>
    %82 = vector.extract_strided_slice %51 {offsets = [0, 8], sizes = [32, 8], strides = [1, 1]} : vector<32x32xf32> to vector<32x8xf32>
    %83 = vector.extract_strided_slice %52 {offsets = [0, 8], sizes = [32, 8], strides = [1, 1]} : vector<32x32xf32> to vector<32x8xf32>
    %84 = vector.extract_strided_slice %53 {offsets = [0, 8], sizes = [32, 8], strides = [1, 1]} : vector<32x32xf32> to vector<32x8xf32>
    %cst_23 = arith.constant dense<0.000000e+00> : vector<32x32xf32>
    %85 = tpu.matmul %82, %83, %cst_23 {dimension_numbers = #tpu.dot_dimension_numbers<[1], [1], [0], [0], [0, 0, 1, 0], [], []>} : vector<32x8xf32>, vector<32x8xf32>, vector<32x32xf32> -> vector<32x32xf32>
    %cst_24 = arith.constant 0.353553385 : f32
    %86 = vector.broadcast %cst_24 : f32 to vector<32x32xf32>
    %87 = arith.mulf %85, %86 : vector<32x32xf32>
    %88 = arith.addf %87, %63 : vector<32x32xf32>
    %cst_25 = arith.constant dense<0xFF800000> : vector<32xf32>
    %89 = vector.multi_reduction <maximumf>, %88, %cst_25 [1] : vector<32x32xf32> to vector<32xf32>
    %90 = vector.shape_cast %89 : vector<32xf32> to vector<32x1xf32>
    %91 = vector.broadcast %90 : vector<32x1xf32> to vector<32x32xf32>
    %92 = arith.subf %88, %91 : vector<32x32xf32>
    %93 = math.exp %92 : vector<32x32xf32>
    %cst_26 = arith.constant dense<0.000000e+00> : vector<32xf32>
    %94 = vector.multi_reduction <add>, %93, %cst_26 [1] : vector<32x32xf32> to vector<32xf32>
    %95 = vector.shape_cast %94 : vector<32xf32> to vector<32x1xf32>
    %96 = tpu.reciprocal %95 {approx = true} : vector<32x1xf32> -> vector<32x1xf32>
    %cst_27 = arith.constant dense<0.000000e+00> : vector<32x8xf32>
    %97 = tpu.matmul %93, %84, %cst_27 {dimension_numbers = #tpu.dot_dimension_numbers<[1], [0], [0], [1], [0, 0, 1, 1], [], []>} : vector<32x32xf32>, vector<32x8xf32>, vector<32x8xf32> -> vector<32x8xf32>
    %98 = vector.broadcast %96 : vector<32x1xf32> to vector<32x8xf32>
    %99 = arith.mulf %97, %98 : vector<32x8xf32>
    %100 = vector.extract_strided_slice %51 {offsets = [0, 16], sizes = [32, 8], strides = [1, 1]} : vector<32x32xf32> to vector<32x8xf32>
    %101 = vector.extract_strided_slice %52 {offsets = [0, 16], sizes = [32, 8], strides = [1, 1]} : vector<32x32xf32> to vector<32x8xf32>
    %102 = vector.extract_strided_slice %53 {offsets = [0, 16], sizes = [32, 8], strides = [1, 1]} : vector<32x32xf32> to vector<32x8xf32>
    %cst_28 = arith.constant dense<0.000000e+00> : vector<32x32xf32>
    %103 = tpu.matmul %100, %101, %cst_28 {dimension_numbers = #tpu.dot_dimension_numbers<[1], [1], [0], [0], [0, 0, 1, 0], [], []>} : vector<32x8xf32>, vector<32x8xf32>, vector<32x32xf32> -> vector<32x32xf32>
    %cst_29 = arith.constant 0.353553385 : f32
    %104 = vector.broadcast %cst_29 : f32 to vector<32x32xf32>
    %105 = arith.mulf %103, %104 : vector<32x32xf32>
    %106 = arith.addf %105, %63 : vector<32x32xf32>
    %cst_30 = arith.constant dense<0xFF800000> : vector<32xf32>
    %107 = vector.multi_reduction <maximumf>, %106, %cst_30 [1] : vector<32x32xf32> to vector<32xf32>
    %108 = vector.shape_cast %107 : vector<32xf32> to vector<32x1xf32>
    %109 = vector.broadcast %108 : vector<32x1xf32> to vector<32x32xf32>
    %110 = arith.subf %106, %109 : vector<32x32xf32>
    %111 = math.exp %110 : vector<32x32xf32>
    %cst_31 = arith.constant dense<0.000000e+00> : vector<32xf32>
    %112 = vector.multi_reduction <add>, %111, %cst_31 [1] : vector<32x32xf32> to vector<32xf32>
    %113 = vector.shape_cast %112 : vector<32xf32> to vector<32x1xf32>
    %114 = tpu.reciprocal %113 {approx = true} : vector<32x1xf32> -> vector<32x1xf32>
    %cst_32 = arith.constant dense<0.000000e+00> : vector<32x8xf32>
    %115 = tpu.matmul %111, %102, %cst_32 {dimension_numbers = #tpu.dot_dimension_numbers<[1], [0], [0], [1], [0, 0, 1, 1], [], []>} : vector<32x32xf32>, vector<32x8xf32>, vector<32x8xf32> -> vector<32x8xf32>
    %116 = vector.broadcast %114 : vector<32x1xf32> to vector<32x8xf32>
    %117 = arith.mulf %115, %116 : vector<32x8xf32>
    %118 = vector.extract_strided_slice %51 {offsets = [0, 24], sizes = [32, 8], strides = [1, 1]} : vector<32x32xf32> to vector<32x8xf32>
    %119 = vector.extract_strided_slice %52 {offsets = [0, 24], sizes = [32, 8], strides = [1, 1]} : vector<32x32xf32> to vector<32x8xf32>
    %120 = vector.extract_strided_slice %53 {offsets = [0, 24], sizes = [32, 8], strides = [1, 1]} : vector<32x32xf32> to vector<32x8xf32>
    %cst_33 = arith.constant dense<0.000000e+00> : vector<32x32xf32>
    %121 = tpu.matmul %118, %119, %cst_33 {dimension_numbers = #tpu.dot_dimension_numbers<[1], [1], [0], [0], [0, 0, 1, 0], [], []>} : vector<32x8xf32>, vector<32x8xf32>, vector<32x32xf32> -> vector<32x32xf32>
    %cst_34 = arith.constant 0.353553385 : f32
    %122 = vector.broadcast %cst_34 : f32 to vector<32x32xf32>
    %123 = arith.mulf %121, %122 : vector<32x32xf32>
    %124 = arith.addf %123, %63 : vector<32x32xf32>
    %cst_35 = arith.constant dense<0xFF800000> : vector<32xf32>
    %125 = vector.multi_reduction <maximumf>, %124, %cst_35 [1] : vector<32x32xf32> to vector<32xf32>
    %126 = vector.shape_cast %125 : vector<32xf32> to vector<32x1xf32>
    %127 = vector.broadcast %126 : vector<32x1xf32> to vector<32x32xf32>
    %128 = arith.subf %124, %127 : vector<32x32xf32>
    %129 = math.exp %128 : vector<32x32xf32>
    %cst_36 = arith.constant dense<0.000000e+00> : vector<32xf32>
    %130 = vector.multi_reduction <add>, %129, %cst_36 [1] : vector<32x32xf32> to vector<32xf32>
    %131 = vector.shape_cast %130 : vector<32xf32> to vector<32x1xf32>
    %132 = tpu.reciprocal %131 {approx = true} : vector<32x1xf32> -> vector<32x1xf32>
    %cst_37 = arith.constant dense<0.000000e+00> : vector<32x8xf32>
    %133 = tpu.matmul %129, %120, %cst_37 {dimension_numbers = #tpu.dot_dimension_numbers<[1], [0], [0], [1], [0, 0, 1, 1], [], []>} : vector<32x32xf32>, vector<32x8xf32>, vector<32x8xf32> -> vector<32x8xf32>
    %134 = vector.broadcast %132 : vector<32x1xf32> to vector<32x8xf32>
    %135 = arith.mulf %133, %134 : vector<32x8xf32>
    %136 = tpu.concatenate %81, %99, %117, %135 in 1 : vector<32x8xf32>, vector<32x8xf32>, vector<32x8xf32>, vector<32x8xf32> -> vector<32x32xf32>
    %cst_38 = arith.constant dense<0.000000e+00> : vector<32x32xf32>
    %137 = tpu.matmul %136, %2, %cst_38 {dimension_numbers = #tpu.dot_dimension_numbers<[1], [0], [0], [1], [0, 0, 1, 1], [], []>} : vector<32x32xf32>, vector<32x32xf32>, vector<32x32xf32> -> vector<32x32xf32>
    %138 = vector.broadcast %9 : vector<1x32xf32> to vector<32x32xf32>
    %139 = arith.addf %137, %138 : vector<32x32xf32>
    %140 = arith.addf %47, %139 : vector<32x32xf32>
    %cst_39 = arith.constant dense<0.000000e+00> : vector<32xf32>
    %141 = vector.multi_reduction <add>, %140, %cst_39 [1] : vector<32x32xf32> to vector<32xf32>
    %142 = vector.shape_cast %141 : vector<32xf32> to vector<32x1xf32>
    %cst_40 = arith.constant 3.200000e+01 : f32
    %143 = vector.broadcast %cst_40 : f32 to vector<32x1xf32>
    %144 = arith.divf %142, %143 : vector<32x1xf32>
    %145 = vector.broadcast %144 : vector<32x1xf32> to vector<32x32xf32>
    %146 = arith.subf %140, %145 : vector<32x32xf32>
    %147 = arith.mulf %146, %146 : vector<32x32xf32>
    %cst_41 = arith.constant dense<0.000000e+00> : vector<32xf32>
    %148 = vector.multi_reduction <add>, %147, %cst_41 [1] : vector<32x32xf32> to vector<32xf32>
    %149 = vector.shape_cast %148 : vector<32xf32> to vector<32x1xf32>
    %cst_42 = arith.constant 3.200000e+01 : f32
    %150 = vector.broadcast %cst_42 : f32 to vector<32x1xf32>
    %151 = arith.divf %149, %150 : vector<32x1xf32>
    %cst_43 = arith.constant 9.99999974E-6 : f32
    %152 = vector.broadcast %cst_43 : f32 to vector<32x1xf32>
    %153 = arith.addf %151, %152 : vector<32x1xf32>
    %154 = math.rsqrt %153 : vector<32x1xf32>
    %155 = vector.broadcast %154 : vector<32x1xf32> to vector<32x32xf32>
    %156 = arith.mulf %146, %155 : vector<32x32xf32>
    %157 = vector.broadcast %12 : vector<1x32xf32> to vector<32x32xf32>
    %158 = arith.mulf %156, %157 : vector<32x32xf32>
    %159 = vector.broadcast %13 : vector<1x32xf32> to vector<32x32xf32>
    %160 = arith.addf %158, %159 : vector<32x32xf32>
    %cst_44 = arith.constant dense<0.000000e+00> : vector<32x64xf32>
    %161 = tpu.matmul %160, %3, %cst_44 {dimension_numbers = #tpu.dot_dimension_numbers<[1], [0], [0], [1], [0, 0, 1, 1], [], []>} : vector<32x32xf32>, vector<32x64xf32>, vector<32x64xf32> -> vector<32x64xf32>
    %162 = vector.broadcast %10 : vector<1x64xf32> to vector<32x64xf32>
    %163 = arith.addf %161, %162 : vector<32x64xf32>
    %cst_45 = arith.constant 0.000000e+00 : f32
    %164 = vector.broadcast %cst_45 : f32 to vector<32x64xf32>
    %165 = arith.maximumf %163, %164 : vector<32x64xf32>
    %cst_46 = arith.constant dense<0.000000e+00> : vector<32x32xf32>
    %166 = tpu.matmul %165, %4, %cst_46 {dimension_numbers = #tpu.dot_dimension_numbers<[1], [0], [0], [1], [0, 0, 1, 1], [], []>} : vector<32x64xf32>, vector<64x32xf32>, vector<32x32xf32> -> vector<32x32xf32>
    %167 = vector.broadcast %11 : vector<1x32xf32> to vector<32x32xf32>
    %168 = arith.addf %166, %167 : vector<32x32xf32>
    %169 = arith.addf %160, %168 : vector<32x32xf32>
    %cst_47 = arith.constant dense<0.000000e+00> : vector<32xf32>
    %170 = vector.multi_reduction <add>, %169, %cst_47 [1] : vector<32x32xf32> to vector<32xf32>
    %171 = vector.shape_cast %170 : vector<32xf32> to vector<32x1xf32>
    %cst_48 = arith.constant 3.200000e+01 : f32
    %172 = vector.broadcast %cst_48 : f32 to vector<32x1xf32>
    %173 = arith.divf %171, %172 : vector<32x1xf32>
    %174 = vector.broadcast %173 : vector<32x1xf32> to vector<32x32xf32>
    %175 = arith.subf %169, %174 : vector<32x32xf32>
    %176 = arith.mulf %175, %175 : vector<32x32xf32>
    %cst_49 = arith.constant dense<0.000000e+00> : vector<32xf32>
    %177 = vector.multi_reduction <add>, %176, %cst_49 [1] : vector<32x32xf32> to vector<32xf32>
    %178 = vector.shape_cast %177 : vector<32xf32> to vector<32x1xf32>
    %cst_50 = arith.constant 3.200000e+01 : f32
    %179 = vector.broadcast %cst_50 : f32 to vector<32x1xf32>
    %180 = arith.divf %178, %179 : vector<32x1xf32>
    %cst_51 = arith.constant 9.99999974E-6 : f32
    %181 = vector.broadcast %cst_51 : f32 to vector<32x1xf32>
    %182 = arith.addf %180, %181 : vector<32x1xf32>
    %183 = math.rsqrt %182 : vector<32x1xf32>
    %184 = vector.broadcast %183 : vector<32x1xf32> to vector<32x32xf32>
    %185 = arith.mulf %175, %184 : vector<32x32xf32>
    %186 = vector.broadcast %14 : vector<1x32xf32> to vector<32x32xf32>
    %187 = arith.mulf %185, %186 : vector<32x32xf32>
    %188 = vector.broadcast %15 : vector<1x32xf32> to vector<32x32xf32>
    %189 = arith.addf %187, %188 : vector<32x32xf32>
    %cst_52 = arith.constant dense<0.000000e+00> : vector<32xf32>
    %190 = vector.multi_reduction <add>, %189, %cst_52 [1] : vector<32x32xf32> to vector<32xf32>
    %191 = vector.shape_cast %190 : vector<32xf32> to vector<32x1xf32>
    %cst_53 = arith.constant 3.200000e+01 : f32
    %192 = vector.broadcast %cst_53 : f32 to vector<32x1xf32>
    %193 = arith.divf %191, %192 : vector<32x1xf32>
    %194 = vector.broadcast %193 : vector<32x1xf32> to vector<32x32xf32>
    %195 = arith.subf %189, %194 : vector<32x32xf32>
    %196 = arith.mulf %195, %195 : vector<32x32xf32>
    %cst_54 = arith.constant dense<0.000000e+00> : vector<32xf32>
    %197 = vector.multi_reduction <add>, %196, %cst_54 [1] : vector<32x32xf32> to vector<32xf32>
    %198 = vector.shape_cast %197 : vector<32xf32> to vector<32x1xf32>
    %cst_55 = arith.constant 3.200000e+01 : f32
    %199 = vector.broadcast %cst_55 : f32 to vector<32x1xf32>
    %200 = arith.divf %198, %199 : vector<32x1xf32>
    %cst_56 = arith.constant 9.99999974E-6 : f32
    %201 = vector.broadcast %cst_56 : f32 to vector<32x1xf32>
    %202 = arith.addf %200, %201 : vector<32x1xf32>
    %203 = math.rsqrt %202 : vector<32x1xf32>
    %204 = vector.broadcast %203 : vector<32x1xf32> to vector<32x32xf32>
    %205 = arith.mulf %195, %204 : vector<32x32xf32>
    %206 = vector.broadcast %16 : vector<1x32xf32> to vector<32x32xf32>
    %207 = arith.mulf %205, %206 : vector<32x32xf32>
    %208 = vector.broadcast %17 : vector<1x32xf32> to vector<32x32xf32>
    %209 = arith.addf %207, %208 : vector<32x32xf32>
    %210 = vector.extract_strided_slice %209 {offsets = [0, 0], sizes = [8, 32], strides = [1, 1]} : vector<32x32xf32> to vector<8x32xf32>
    %211 = vector.extract_strided_slice %209 {offsets = [8, 0], sizes = [8, 32], strides = [1, 1]} : vector<32x32xf32> to vector<8x32xf32>
    %212 = vector.extract_strided_slice %209 {offsets = [16, 0], sizes = [8, 32], strides = [1, 1]} : vector<32x32xf32> to vector<8x32xf32>
    %213 = vector.extract_strided_slice %209 {offsets = [24, 0], sizes = [8, 32], strides = [1, 1]} : vector<32x32xf32> to vector<8x32xf32>
    %214 = tpu.concatenate %210, %211, %212, %213 in 1 : vector<8x32xf32>, vector<8x32xf32>, vector<8x32xf32>, vector<8x32xf32> -> vector<8x128xf32>
    %cst_57 = arith.constant dense<0.000000e+00> : vector<8x128xf32>
    %215 = tpu.matmul %214, %5, %cst_57 {dimension_numbers = #tpu.dot_dimension_numbers<[1], [0], [0], [1], [0, 0, 1, 1], [], []>} : vector<8x128xf32>, vector<128x128xf32>, vector<8x128xf32> -> vector<8x128xf32>
    %216 = vector.broadcast %18 : vector<1x128xf32> to vector<8x128xf32>
    %217 = arith.addf %215, %216 : vector<8x128xf32>
    %218 = vector.broadcast %33 : vector<8x1xf32> to vector<8x128xf32>
    %219 = arith.mulf %217, %218 : vector<8x128xf32>
    %220 = vector.broadcast %23 : vector<8x1xf32> to vector<8x128xf32>
    %221 = arith.addf %219, %220 : vector<8x128xf32>
    %c0_58 = arith.constant 0 : index
    %c0_59 = arith.constant 0 : index
    %222 = vector.load %arg2[%c0_58, %c0_59] : memref<8x128xf32, #tpu.memory_space<vmem>>, vector<8x128xf32>
    tpu.vector_store %arg2[%c0_58, %c0_59], %221 {strides = array<i32>} : memref<8x128xf32, #tpu.memory_space<vmem>>, vector<8x128xf32>,
    return
  }
}

</mosaic_0001>

<llo_original>
// kernel: _forward_jit.1
$region0: #{_forward_jit.1}
  #allocation0 [shape = 'u32[]', space=smem, size = 0x4, offset = 0x4, fixed_abs, tag = 'smem constant byte address 0x4 - core index']
  #allocation1 [shape = 'u32[144,128]{1,0:T(1,128)}', space=vmem, size = 0x12000, scoped, tag = 'internal scratch']
  %s0 = inlined_call_operand.hbm [shape: f32[8,32], index: 0, kind: input, shape index: {}]
  %s1 = inlined_call_operand.hbm [shape: f32[320,128], index: 1, kind: input, shape index: {}]
  %s2 = inlined_call_operand.hbm [shape: f32[8,128], index: 2, kind: output, shape index: {}]
  %s3 = sld [smem:[#allocation0]]
  $region26: #{_forward_jit.1} parent=0
    _
  %s5 = ssub.s32 1, %s3
  %s6 = scalar_select 0, %s5, %s3
  $region1: #{_forward_jit.1} parent=0
    #allocation2 [shape = 'u8[4096]{0}', space=vmem, size = 0x1000, scoped, tag = 'input window, operand 0, single buffered']
    #allocation3 [shape = 's32[1]{0}', space=sflag, size = 0x4, scoped, tag = 'scoped memory for _forward_jit.1']
    #allocation4 [shape = 's32[1]{0}', space=sflag, size = 0x4, scoped, tag = 'scoped memory for _forward_jit.1']
    #allocation5 [shape = 'u8[163840]{0}', space=vmem, size = 0x28000, scoped, tag = 'input window, operand 1, single buffered']
    #allocation6 [shape = 's32[1]{0}', space=sflag, size = 0x4, scoped, tag = 'scoped memory for _forward_jit.1']
    #allocation7 [shape = 'u8[4096]{0}', space=vmem, size = 0x1000, scoped, tag = 'output window, operand 0, single buffered']
    %7 = vsyncpa [#allocation3], 0
    %8 = vsyncpa [#allocation6], 0
    %9 = vsyncpa [#allocation4], 0
    // Predicated region
    $region2: #{_forward_jit.1} parent=1 // pred_check
      _
    $region3: #{_forward_jit.1} parent=1 // pred_check_branch
      %11 = sbr.rel (0) target = $region5
    $region4: #{_forward_jit.1} parent=1 // pred_region
      %s13 = ssub.s32 128, 128
      %14 = vsyncadd [#allocation3], %s13
      %s16 = sshll.u32 [#allocation2], 4
      %s17 = int_to_ptr.vmem [resolvable:$true] %s16
      %19 = dma.hbm_to_vmem [thread:$0]  %s0, 128, %s17, [#allocation3]
    $region5: #{_forward_jit.1} parent=1 // pred_fallthru
      _
    // Predicated region
    $region6: #{_forward_jit.1} parent=1 // pred_check
      _
    $region7: #{_forward_jit.1} parent=1 // pred_check_branch
      %21 = sbr.rel (0) target = $region9
    $region8: #{_forward_jit.1} parent=1 // pred_region
      %s23 = ssub.s32 5120, 5120
      %24 = vsyncadd [#allocation6], %s23
      %s25 = sshll.u32 [#allocation5], 4
      %s26 = int_to_ptr.vmem [resolvable:$true] %s25
      %31 = dma.hbm_to_vmem [thread:$0]  %s1, 5120, %s26, [#allocation6], 128, 128, 8
    $region9: #{_forward_jit.1} parent=1 // pred_fallthru
      _
    // Predicated region
    $region10: #{_forward_jit.1} parent=1 // pred_check
      _
    $region11: #{_forward_jit.1} parent=1 // pred_check_branch
      %33 = sbr.rel (0) target = $region13
    $region12: #{_forward_jit.1} parent=1 // pred_region
      %34 = dma.done [#allocation3], 128
    $region13: #{_forward_jit.1} parent=1 // pred_fallthru
      _
    // Predicated region
    $region14: #{_forward_jit.1} parent=1 // pred_check
      _
    $region15: #{_forward_jit.1} parent=1 // pred_check_branch
      %36 = sbr.rel (0) target = $region17
    $region16: #{_forward_jit.1} parent=1 // pred_region
      %37 = dma.done [#allocation6], 5120
    $region17: #{_forward_jit.1} parent=1 // pred_fallthru
      _
    %v38 = vld [vmem:[#allocation5] sm:$0xff]
    %v39 = vld [vmem:[#allocation5 + $0x8] sm:$0xff]
    %v40 = vld [vmem:[#allocation5 + $0x10] sm:$0xff]
    %v41 = vld [vmem:[#allocation5 + $0x18] sm:$0xff]
    %v42 = vld [vmem:[#allocation5 + $0x20] sm:$0xff]
    %v43 = vld [vmem:[#allocation5 + $0x28] sm:$0xff]
    %v44 = vld [vmem:[#allocation5 + $0x30] sm:$0xff]
    %v45 = vld [vmem:[#allocation5 + $0x38] sm:$0xff]
    %v46 = vld [vmem:[#allocation5 + $0x40] sm:$0xff]
    %v47 = vld [vmem:[#allocation5 + $0x48] sm:$0xff]
    %v48 = vld [vmem:[#allocation5 + $0x50] sm:$0xff]
    %v49 = vld [vmem:[#allocation5 + $0x58] sm:$0xff]
    %v50 = vld [vmem:[#allocation5 + $0x60] sm:$0xff]
    %v51 = vld [vmem:[#allocation5 + $0x68] sm:$0xff]
    %v52 = vld [vmem:[#allocation5 + $0x70] sm:$0xff]
    %v53 = vld [vmem:[#allocation5 + $0x78] sm:$0xff]
    %v54 = vld [vmem:[#allocation5 + $0x80] sm:$0xff]
    %v55 = vld [vmem:[#allocation5 + $0x88] sm:$0xff]
    %v56 = vld [vmem:[#allocation5 + $0x90] sm:$0xff]
    %v57 = vld [vmem:[#allocation5 + $0x98] sm:$0xff]
    %v58 = vld [vmem:[#allocation5 + $0xa0] sm:$0xff]
    %v59 = vld [vmem:[#allocation5 + $0xa8] sm:$0xff]
    %v60 = vld [vmem:[#allocation5 + $0xb0] sm:$0xff]
    %v61 = vld [vmem:[#allocation5 + $0xb8] sm:$0xff]
    %v62 = vld [vmem:[#allocation5 + $0xc0] sm:$0xff]
    %v63 = vld [vmem:[#allocation5 + $0xc8] sm:$0xff]
    %v64 = vld [vmem:[#allocation5 + $0xd0] sm:$0xff]
    %v65 = vld [vmem:[#allocation5 + $0xd8] sm:$0xff]
    %v66 = vld [vmem:[#allocation5 + $0xe0] sm:$0xff]
    %v67 = vld [vmem:[#allocation5 + $0xe8] sm:$0xff]
    %v68 = vld [vmem:[#allocation5 + $0xf0] sm:$0xff]
    %v69 = vld [vmem:[#allocation5 + $0xf8] sm:$0xff]
    %v70 = vld [vmem:[#allocation5 + $0x100] sm:$0xff]
    %v71 = vld [vmem:[#allocation5 + $0x108] sm:$0xff]
    %v72 = vld [vmem:[#allocation5 + $0x110] sm:$0xff]
    %v73 = vld [vmem:[#allocation5 + $0x118] sm:$0xff]
    %v74 = vld [vmem:[#allocation5 + $0x120] sm:$0xff]
    %v75 = vld [vmem:[#allocation5 + $0x128] sm:$0xff]
    %v76 = vld [vmem:[#allocation5 + $0x130] sm:$0xff]
    %v77 = vld [vmem:[#allocation5 + $0x138] sm:$0xff]
    %v78 = vld [vmem:[#allocation2] sm:$0xff]
    %vm79 = vcmask 261120
    %v80 = vsel %vm79, %v78, 0.0
    %81 = vadd.xlane.f32.xlu0 %v80
    %v82 = vpop.xlane.xlu0 %81
    %v83 = vrcp.pop 32.0
    %v84 = vmul.f32 %v82, %v83
    %v85 = vsub.f32 %v78, %v84
    %v86 = vmul.f32 %v85, %v85
    %v87 = vsel %vm79, %v86, 0.0
    %88 = vadd.xlane.f32.xlu0 %v87
    %v89 = vpop.xlane.xlu0 %88
    %v90 = vmul.f32 %v89, %v83
    %v91 = vadd.f32 %v90, 1e-05
    %v92 = vrsqrt.pop %v91
    %v93 = vmul.f32 %v91, %v92
    %vm94 = vcmp.eq.f32.partialorder %v91, inf
    %v95 = vsel %vm94, %v91, %v93
    %vm96 = vcmp.eq.f32.partialorder %v91, 0.0
    %v97 = vand.u32 %v91, 2147483648
    %v98 = vsel %vm96, %v97, %v95
    %v99 = vrcp.pop %v98
    %v100 = vmul.f32 %v85, %v99
    %102 = vset.pattern.permute.xlu0 31
    %103 = vperm.xlu0 %102, %v100
    %v104 = vpop.permute.xlu0 %103
    %v106 = vsel %vm79, %v100, %v104
    %108 = vrot.lane.b32.xlu0 %v106, 120
    %v109 = vpop.permute.xlu0 %108
    %110 = vrot.lane.b32.xlu0 %v106, 112
    %v111 = vpop.permute.xlu0 %110
    %112 = vrot.lane.b32.xlu0 %v106, 104
    %v113 = vpop.permute.xlu0 %112
    %v114 = vlaneseq
    %v115 = vshrl.u32 %v114, 7
    %v116 = vsub.s32 0, %v115
    %v117 = vrot.slane %v76, %v116
    %vm118 = vcmask 130048
    %v119 = vsel %vm118, %v106, 0
    %v121 = vsel %vm118, %v109, 0
    %v123 = vsel %vm118, %v111, 0
    %v125 = vsel %vm118, %v113, 0
    %127 = vmatprep.subr.mxu0 0.0
    %128 = vmatpush1.msra.mxu0 %v38
    %129 = vmatprep.subr.mxu0 0.0
    %130 = vmatpush1.msra.mxu0 %v39
    %131 = vmatprep.subr.mxu0 0.0
    %132 = vmatpush1.msra.mxu0 0.0
    %133 = vmatprep.subr.mxu0 0.0
    %134 = vmatpush1.msra.mxu0 0.0
    %135 = vmatprep.subr.mxu0 0.0
    %136 = vmatpush1.msra.mxu0 0.0
    %137 = vmatprep.subr.mxu0 0.0
    %138 = vmatpush1.msra.mxu0 0.0
    %139 = vmatprep.subr.mxu0 0.0
    %140 = vmatpush1.msra.mxu0 0.0
    %141 = vmatprep.subr.mxu0 0.0
    %142 = vmatpush1.msra.mxu0 0.0
    %143 = vmatprep.subr.mxu0 0.0
    %144 = vmatpush1.msra.mxu0 0.0
    %145 = vmatprep.subr.mxu0 0.0
    %146 = vmatpush1.msra.mxu0 0.0
    %147 = vmatprep.subr.mxu0 0.0
    %148 = vmatpush1.msra.mxu0 0.0
    %149 = vmatprep.subr.mxu0 0.0
    %150 = vmatpush1.msra.mxu0 0.0
    %151 = vmatprep.subr.mxu0 0.0
    %152 = vmatpush1.msra.mxu0 0.0
    %153 = vmatprep.subr.mxu0 0.0
    %154 = vmatpush1.msra.mxu0 0.0
    %155 = vmatprep.subr.mxu0 0.0
    %156 = vmatpush1.msra.mxu0 0.0
    %157 = vmatprep.subr.mxu0 0.0
    %158 = vmatpush1.msra.mxu0 0.0
    %159 = vmatprep.subr.mxu0 0.0
    %160 = vmatpush1.msra.mxu0 0.0
    %161 = vmatprep.subr.mxu0 0.0
    %162 = vmatpush1.msra.mxu0 0.0
    %163 = vmatprep.subr.mxu0 0.0
    %164 = vmatpush1.msra.mxu0 0.0
    %165 = vmatprep.subr.mxu0 0.0
    %166 = vmatpush1.msra.mxu0 0.0
    %167 = vmatprep.subr.mxu0 0.0
    %168 = vmatpush1.msra.mxu0 0.0
    %169 = vmatprep.subr.mxu0 0.0
    %170 = vmatpush1.msra.mxu0 0.0
    %171 = vmatprep.subr.mxu0 0.0
    %172 = vmatpush1.msra.mxu0 0.0
    %173 = vmatprep.subr.mxu0 0.0
    %174 = vmatpush1.msra.mxu0 0.0
    %175 = vmatprep.subr.mxu0 0.0
    %176 = vmatpush1.msra.mxu0 0.0
    %177 = vmatprep.subr.mxu0 0.0
    %178 = vmatpush1.msra.mxu0 0.0
    %179 = vmatprep.subr.mxu0 0.0
    %180 = vmatpush1.msra.mxu0 0.0
    %181 = vmatprep.subr.mxu0 0.0
    %182 = vmatpush1.msra.mxu0 0.0
    %183 = vmatprep.subr.mxu0 0.0
    %184 = vmatpush1.msra.mxu0 0.0
    %185 = vmatprep.subr.mxu0 0.0
    %186 = vmatpush1.msra.mxu0 0.0
    %187 = vmatprep.subr.mxu0 0.0
    %188 = vmatpush1.msra.mxu0 0.0
    %189 = vmatprep.subr.mxu0 0.0
    %190 = vmatpush1.msra.mxu0 0.0
    %191 = vmatprep.mubr.f32.mxu0 0.0
    %192 = vmatmul.mubr.f32.gmra.mrb[0].mxu0 %v119
    %v193 = vpop.f32.mrb[0].mxu0
    %v194 = vadd.f32 %v117, %v193
    %v195 = vpop.f32.mrb[0].mxu0
    %196 = vmatprep.mubr.f32.mxu0 0.0
    %197 = vmatmul.mubr.f32.gmra.mrb[0].mxu0 %v121
    %v198 = vpop.f32.mrb[0].mxu0
    %v199 = vadd.f32 %v117, %v198
    %v200 = vpop.f32.mrb[0].mxu0
    %201 = vmatprep.mubr.f32.mxu0 0.0
    %202 = vmatmul.mubr.f32.gmra.mrb[0].mxu0 %v123
    %v203 = vpop.f32.mrb[0].mxu0
    %v204 = vadd.f32 %v117, %v203
    %v205 = vpop.f32.mrb[0].mxu0
    %206 = vmatprep.mubr.f32.mxu0 0.0
    %207 = vmatmul.mubr.f32.gmra.mrb[0].mxu0 %v125
    %v208 = vpop.f32.mrb[0].mxu0
    %v209 = vadd.f32 %v117, %v208
    %v210 = vpop.f32.mrb[0].mxu0
    %211 = vdwg.mxu0
    %v212 = vlaneseq
    %v213 = vshrl.u32 %v212, 7
    %v214 = vsub.s32 1, %v213
    %v215 = vrot.slane %v76, %v214
    %v217 = vsel %vm79, %v194, 0
    %v220 = vsel %vm79, %v199, 0
    %v223 = vsel %vm79, %v204, 0
    %v226 = vsel %vm79, %v209, 0
    %228 = vmatprep.subr.mxu0 0.0
    %229 = vmatpush1.msra.mxu0 %v40
    %230 = vmatprep.subr.mxu0 0.0
    %231 = vmatpush1.msra.mxu0 %v41
    %232 = vmatprep.subr.mxu0 0.0
    %233 = vmatpush1.msra.mxu0 %v42
    %234 = vmatprep.subr.mxu0 0.0
    %235 = vmatpush1.msra.mxu0 %v43
    %236 = vmatprep.subr.mxu0 0.0
    %237 = vmatpush1.msra.mxu0 0.0
    %238 = vmatprep.subr.mxu0 0.0
    %239 = vmatpush1.msra.mxu0 0.0
    %240 = vmatprep.subr.mxu0 0.0
    %241 = vmatpush1.msra.mxu0 0.0
    %242 = vmatprep.subr.mxu0 0.0
    %243 = vmatpush1.msra.mxu0 0.0
    %244 = vmatprep.subr.mxu0 0.0
    %245 = vmatpush1.msra.mxu0 0.0
    %246 = vmatprep.subr.mxu0 0.0
    %247 = vmatpush1.msra.mxu0 0.0
    %248 = vmatprep.subr.mxu0 0.0
    %249 = vmatpush1.msra.mxu0 0.0
    %250 = vmatprep.subr.mxu0 0.0
    %251 = vmatpush1.msra.mxu0 0.0
    %252 = vmatprep.subr.mxu0 0.0
    %253 = vmatpush1.msra.mxu0 0.0
    %254 = vmatprep.subr.mxu0 0.0
    %255 = vmatpush1.msra.mxu0 0.0
    %256 = vmatprep.subr.mxu0 0.0
    %257 = vmatpush1.msra.mxu0 0.0
    %258 = vmatprep.subr.mxu0 0.0
    %259 = vmatpush1.msra.mxu0 0.0
    %260 = vmatprep.subr.mxu0 0.0
    %261 = vmatpush1.msra.mxu0 0.0
    %262 = vmatprep.subr.mxu0 0.0
    %263 = vmatpush1.msra.mxu0 0.0
    %264 = vmatprep.subr.mxu0 0.0
    %265 = vmatpush1.msra.mxu0 0.0
    %266 = vmatprep.subr.mxu0 0.0
    %267 = vmatpush1.msra.mxu0 0.0
    %268 = vmatprep.subr.mxu0 0.0
    %269 = vmatpush1.msra.mxu0 0.0
    %270 = vmatprep.subr.mxu0 0.0
    %271 = vmatpush1.msra.mxu0 0.0
    %272 = vmatprep.subr.mxu0 0.0
    %273 = vmatpush1.msra.mxu0 0.0
    %274 = vmatprep.subr.mxu0 0.0
    %275 = vmatpush1.msra.mxu0 0.0
    %276 = vmatprep.subr.mxu0 0.0
    %277 = vmatpush1.msra.mxu0 0.0
    %278 = vmatprep.subr.mxu0 0.0
    %279 = vmatpush1.msra.mxu0 0.0
    %280 = vmatprep.subr.mxu0 0.0
    %281 = vmatpush1.msra.mxu0 0.0
    %282 = vmatprep.subr.mxu0 0.0
    %283 = vmatpush1.msra.mxu0 0.0
    %284 = vmatprep.subr.mxu0 0.0
    %285 = vmatpush1.msra.mxu0 0.0
    %286 = vmatprep.subr.mxu0 0.0
    %287 = vmatpush1.msra.mxu0 0.0
    %288 = vmatprep.subr.mxu0 0.0
    %289 = vmatpush1.msra.mxu0 0.0
    %290 = vmatprep.subr.mxu0 0.0
    %291 = vmatpush1.msra.mxu0 0.0
    %292 = vmatprep.mubr.f32.mxu0 0.0
    %293 = vmatmul.mubr.f32.gmra.mrb[0].mxu0 %v217
    %v294 = vpop.f32.mrb[0].mxu0
    %v295 = vadd.f32 %v215, %v294
    %v296 = vpop.f32.mrb[0].mxu0
    %297 = vmatprep.mubr.f32.mxu0 0.0
    %298 = vmatmul.mubr.f32.gmra.mrb[0].mxu0 %v220
    %v299 = vpop.f32.mrb[0].mxu0
    %v300 = vadd.f32 %v215, %v299
    %v301 = vpop.f32.mrb[0].mxu0
    %302 = vmatprep.mubr.f32.mxu0 0.0
    %303 = vmatmul.mubr.f32.gmra.mrb[0].mxu0 %v223
    %v304 = vpop.f32.mrb[0].mxu0
    %v305 = vadd.f32 %v215, %v304
    %v306 = vpop.f32.mrb[0].mxu0
    %307 = vmatprep.mubr.f32.mxu0 0.0
    %308 = vmatmul.mubr.f32.gmra.mrb[0].mxu0 %v226
    %v309 = vpop.f32.mrb[0].mxu0
    %v310 = vadd.f32 %v215, %v309
    %v311 = vpop.f32.mrb[0].mxu0
    %312 = vdwg.mxu0
    %v313 = vlaneseq
    %v314 = vshrl.u32 %v313, 7
    %v315 = vadd.s32 %v314, 8
    %v316 = vadd.s32 %v314, 16
    %v317 = vadd.s32 %v314, 24
    %v318 = vand.u32 %v314, 7
    %v319 = vand.u32 %v315, 7
    %v320 = vand.u32 %v316, 7
    %v321 = vand.u32 %v317, 7
    %v322 = vlaneseq
    %v323 = vand.u32 %v322, 127
    %v324 = vand.u32 %v323, 7
    %vm325 = vcmp.eq.s32.totalorder %v318, %v324
    %vm326 = vcmp.eq.s32.totalorder %v319, %v324
    %vm327 = vcmp.eq.s32.totalorder %v320, %v324
    %vm328 = vcmp.eq.s32.totalorder %v321, %v324
    %v329 = vsel %vm325, 0.0, -1e+30
    %v330 = vsel %vm326, 0.0, -1e+30
    %v331 = vsel %vm327, 0.0, -1e+30
    %v332 = vsel %vm328, 0.0, -1e+30
    %337 = vrot.lane.b32.xlu0 %v295, 96
    %v338 = vpop.permute.xlu0 %337
    %339 = vrot.lane.b32.xlu0 %v300, 96
    %v340 = vpop.permute.xlu0 %339
    %341 = vrot.lane.b32.xlu0 %v305, 96
    %v342 = vpop.permute.xlu0 %341
    %343 = vrot.lane.b32.xlu0 %v310, 96
    %v344 = vpop.permute.xlu0 %343
    %vm345 = vcmask 64512
    %v346 = vsel %vm345, %v295, 0
    %v348 = vsel %vm345, %v300, 0
    %v350 = vsel %vm345, %v305, 0
    %v352 = vsel %vm345, %v310, 0
    %v354 = vsel %vm345, %v338, 0
    %v356 = vsel %vm345, %v340, 0
    %v358 = vsel %vm345, %v342, 0
    %v360 = vsel %vm345, %v344, 0
    %362 = vmatprep.subr.mxu0 0.0
    %363 = vmatpush1.xpose.msra.mxu0 %v354
    %364 = vmatprep.subr.mxu0 0.0
    %365 = vmatpush1.xpose.msra.mxu0 %v356
    %366 = vmatprep.subr.mxu0 0.0
    %367 = vmatpush1.xpose.msra.mxu0 %v358
    %368 = vmatprep.subr.mxu0 0.0
    %369 = vmatpush1.xpose.msra.mxu0 %v360
    %370 = vmatprep.subr.mxu0 0.0
    %371 = vmatpush1.xpose.msra.mxu0 0.0
    %372 = vmatprep.subr.mxu0 0.0
    %373 = vmatpush1.xpose.msra.mxu0 0.0
    %374 = vmatprep.subr.mxu0 0.0
    %375 = vmatpush1.xpose.msra.mxu0 0.0
    %376 = vmatprep.subr.mxu0 0.0
    %377 = vmatpush1.xpose.msra.mxu0 0.0
    %378 = vmatprep.subr.mxu0 0.0
    %379 = vmatpush1.xpose.msra.mxu0 0.0
    %380 = vmatprep.subr.mxu0 0.0
    %381 = vmatpush1.xpose.msra.mxu0 0.0
    %382 = vmatprep.subr.mxu0 0.0
    %383 = vmatpush1.xpose.msra.mxu0 0.0
    %384 = vmatprep.subr.mxu0 0.0
    %385 = vmatpush1.xpose.msra.mxu0 0.0
    %386 = vmatprep.subr.mxu0 0.0
    %387 = vmatpush1.xpose.msra.mxu0 0.0
    %388 = vmatprep.subr.mxu0 0.0
    %389 = vmatpush1.xpose.msra.mxu0 0.0
    %390 = vmatprep.subr.mxu0 0.0
    %391 = vmatpush1.xpose.msra.mxu0 0.0
    %392 = vmatprep.subr.mxu0 0.0
    %393 = vmatpush1.xpose.msra.mxu0 0.0
    %394 = vmatprep.subr.mxu0 0.0
    %395 = vmatpush1.xpose.msra.mxu0 0.0
    %396 = vmatprep.subr.mxu0 0.0
    %397 = vmatpush1.xpose.msra.mxu0 0.0
    %398 = vmatprep.subr.mxu0 0.0
    %399 = vmatpush1.xpose.msra.mxu0 0.0
    %400 = vmatprep.subr.mxu0 0.0
    %401 = vmatpush1.xpose.msra.mxu0 0.0
    %402 = vmatprep.subr.mxu0 0.0
    %403 = vmatpush1.xpose.msra.mxu0 0.0
    %404 = vmatprep.subr.mxu0 0.0
    %405 = vmatpush1.xpose.msra.mxu0 0.0
    %406 = vmatprep.subr.mxu0 0.0
    %407 = vmatpush1.xpose.msra.mxu0 0.0
    %408 = vmatprep.subr.mxu0 0.0
    %409 = vmatpush1.xpose.msra.mxu0 0.0
    %410 = vmatprep.subr.mxu0 0.0
    %411 = vmatpush1.xpose.msra.mxu0 0.0
    %412 = vmatprep.subr.mxu0 0.0
    %413 = vmatpush1.xpose.msra.mxu0 0.0
    %414 = vmatprep.subr.mxu0 0.0
    %415 = vmatpush1.xpose.msra.mxu0 0.0
    %416 = vmatprep.subr.mxu0 0.0
    %417 = vmatpush1.xpose.msra.mxu0 0.0
    %418 = vmatprep.subr.mxu0 0.0
    %419 = vmatpush1.xpose.msra.mxu0 0.0
    %420 = vmatprep.subr.mxu0 0.0
    %421 = vmatpush1.xpose.msra.mxu0 0.0
    %422 = vmatprep.subr.mxu0 0.0
    %423 = vmatpush1.xpose.msra.mxu0 0.0
    %424 = vmatprep.subr.mxu0 0.0
    %425 = vmatpush1.xpose.msra.mxu0 0.0
    %426 = vmatprep.mubr.f32.mxu0 0.0
    %427 = vmatmul.mubr.f32.gmra.mrb[0].mxu0 %v346
    %v428 = vpop.f32.mrb[0].mxu0
    %v429 = vadd.f32 0.0, %v428
    %v430 = vpop.f32.mrb[0].mxu0
    %431 = vmatprep.mubr.f32.mxu0 0.0
    %432 = vmatmul.mubr.f32.gmra.mrb[0].mxu0 %v348
    %v433 = vpop.f32.mrb[0].mxu0
    %v434 = vadd.f32 0.0, %v433
    %v435 = vpop.f32.mrb[0].mxu0
    %436 = vmatprep.mubr.f32.mxu0 0.0
    %437 = vmatmul.mubr.f32.gmra.mrb[0].mxu0 %v350
    %v438 = vpop.f32.mrb[0].mxu0
    %v439 = vadd.f32 0.0, %v438
    %v440 = vpop.f32.mrb[0].mxu0
    %441 = vmatprep.mubr.f32.mxu0 0.0
    %442 = vmatmul.mubr.f32.gmra.mrb[0].mxu0 %v352
    %v443 = vpop.f32.mrb[0].mxu0
    %v444 = vadd.f32 0.0, %v443
    %v445 = vpop.f32.mrb[0].mxu0
    %446 = vdwg.mxu0
    %v447 = vmul.f32 %v429, 0.35355338
    %v448 = vmul.f32 %v434, 0.35355338
    %v449 = vmul.f32 %v439, 0.35355338
    %v450 = vmul.f32 %v444, 0.35355338
    %v451 = vadd.f32 %v447, %v329
    %v452 = vadd.f32 %v448, %v330
    %v453 = vadd.f32 %v449, %v331
    %v454 = vadd.f32 %v450, %v332
    %v455 = vsel %vm79, %v451, -inf
    %456 = vmax.xlane.f32.xlu0 %v455
    %v457 = vpop.xlane.xlu0 %456
    %v458 = vsel %vm79, %v452, -inf
    %459 = vmax.xlane.f32.xlu0 %v458
    %v460 = vpop.xlane.xlu0 %459
    %v461 = vsel %vm79, %v453, -inf
    %462 = vmax.xlane.f32.xlu0 %v461
    %v463 = vpop.xlane.xlu0 %462
    %v464 = vsel %vm79, %v454, -inf
    %465 = vmax.xlane.f32.xlu0 %v464
    %v466 = vpop.xlane.xlu0 %465
    %v467 = vsub.f32 %v451, %v457
    %v468 = vsub.f32 %v452, %v460
    %v469 = vsub.f32 %v453, %v463
    %v470 = vsub.f32 %v454, %v466
    %v471 = vmul.f32 %v467, 1.442695
    %v472 = vpow.pop %v471
    %v473 = vmul.f32 %v468, 1.442695
    %v474 = vpow.pop %v473
    %v475 = vmul.f32 %v469, 1.442695
    %v476 = vpow.pop %v475
    %v477 = vmul.f32 %v470, 1.442695
    %v478 = vpow.pop %v477
    %v479 = vsel %vm79, %v472, 0.0
    %480 = vadd.xlane.f32.xlu0 %v479
    %v481 = vpop.xlane.xlu0 %480
    %v482 = vsel %vm79, %v474, 0.0
    %483 = vadd.xlane.f32.xlu0 %v482
    %v484 = vpop.xlane.xlu0 %483
    %v485 = vsel %vm79, %v476, 0.0
    %486 = vadd.xlane.f32.xlu0 %v485
    %v487 = vpop.xlane.xlu0 %486
    %v488 = vsel %vm79, %v478, 0.0
    %489 = vadd.xlane.f32.xlu0 %v488
    %v490 = vpop.xlane.xlu0 %489
    %v491 = vrcp.pop %v481
    %v492 = vrcp.pop %v484
    %v493 = vrcp.pop %v487
    %v494 = vrcp.pop %v490
    %495 = vrot.lane.b32.xlu0 %v295, 64
    %v496 = vpop.permute.xlu0 %495
    %497 = vrot.lane.b32.xlu0 %v300, 64
    %v498 = vpop.permute.xlu0 %497
    %499 = vrot.lane.b32.xlu0 %v305, 64
    %v500 = vpop.permute.xlu0 %499
    %501 = vrot.lane.b32.xlu0 %v310, 64
    %v502 = vpop.permute.xlu0 %501
    %v508 = vsel %vm79, %v472, 0
    %v511 = vsel %vm79, %v474, 0
    %v514 = vsel %vm79, %v476, 0
    %v517 = vsel %vm79, %v478, 0
    %519 = vmatprep.subr.mxu0 0.0
    %520 = vmatpush1.msra.mxu0 %v496
    %521 = vmatprep.subr.mxu0 0.0
    %522 = vmatpush1.msra.mxu0 %v498
    %523 = vmatprep.subr.mxu0 0.0
    %524 = vmatpush1.msra.mxu0 %v500
    %525 = vmatprep.subr.mxu0 0.0
    %526 = vmatpush1.msra.mxu0 %v502
    %527 = vmatprep.subr.mxu0 0.0
    %528 = vmatpush1.msra.mxu0 0.0
    %529 = vmatprep.subr.mxu0 0.0
    %530 = vmatpush1.msra.mxu0 0.0
    %531 = vmatprep.subr.mxu0 0.0
    %532 = vmatpush1.msra.mxu0 0.0
    %533 = vmatprep.subr.mxu0 0.0
    %534 = vmatpush1.msra.mxu0 0.0
    %535 = vmatprep.subr.mxu0 0.0
    %536 = vmatpush1.msra.mxu0 0.0
    %537 = vmatprep.subr.mxu0 0.0
    %538 = vmatpush1.msra.mxu0 0.0
    %539 = vmatprep.subr.mxu0 0.0
    %540 = vmatpush1.msra.mxu0 0.0
    %541 = vmatprep.subr.mxu0 0.0
    %542 = vmatpush1.msra.mxu0 0.0
    %543 = vmatprep.subr.mxu0 0.0
    %544 = vmatpush1.msra.mxu0 0.0
    %545 = vmatprep.subr.mxu0 0.0
    %546 = vmatpush1.msra.mxu0 0.0
    %547 = vmatprep.subr.mxu0 0.0
    %548 = vmatpush1.msra.mxu0 0.0
    %549 = vmatprep.subr.mxu0 0.0
    %550 = vmatpush1.msra.mxu0 0.0
    %551 = vmatprep.subr.mxu0 0.0
    %552 = vmatpush1.msra.mxu0 0.0
    %553 = vmatprep.subr.mxu0 0.0
    %554 = vmatpush1.msra.mxu0 0.0
    %555 = vmatprep.subr.mxu0 0.0
    %556 = vmatpush1.msra.mxu0 0.0
    %557 = vmatprep.subr.mxu0 0.0
    %558 = vmatpush1.msra.mxu0 0.0
    %559 = vmatprep.subr.mxu0 0.0
    %560 = vmatpush1.msra.mxu0 0.0
    %561 = vmatprep.subr.mxu0 0.0
    %562 = vmatpush1.msra.mxu0 0.0
    %563 = vmatprep.subr.mxu0 0.0
    %564 = vmatpush1.msra.mxu0 0.0
    %565 = vmatprep.subr.mxu0 0.0
    %566 = vmatpush1.msra.mxu0 0.0
    %567 = vmatprep.subr.mxu0 0.0
    %568 = vmatpush1.msra.mxu0 0.0
    %569 = vmatprep.subr.mxu0 0.0
    %570 = vmatpush1.msra.mxu0 0.0
    %571 = vmatprep.subr.mxu0 0.0
    %572 = vmatpush1.msra.mxu0 0.0
    %573 = vmatprep.subr.mxu0 0.0
    %574 = vmatpush1.msra.mxu0 0.0
    %575 = vmatprep.subr.mxu0 0.0
    %576 = vmatpush1.msra.mxu0 0.0
    %577 = vmatprep.subr.mxu0 0.0
    %578 = vmatpush1.msra.mxu0 0.0
    %579 = vmatprep.subr.mxu0 0.0
    %580 = vmatpush1.msra.mxu0 0.0
    %581 = vmatprep.subr.mxu0 0.0
    %582 = vmatpush1.msra.mxu0 0.0
    %583 = vmatprep.mubr.f32.mxu0 0.0
    %584 = vmatmul.mubr.f32.gmra.mrb[0].mxu0 %v508
    %v585 = vpop.f32.mrb[0].mxu0
    %v586 = vadd.f32 0.0, %v585
    %v587 = vpop.f32.mrb[0].mxu0
    %588 = vmatprep.mubr.f32.mxu0 0.0
    %589 = vmatmul.mubr.f32.gmra.mrb[0].mxu0 %v511
    %v590 = vpop.f32.mrb[0].mxu0
    %v591 = vadd.f32 0.0, %v590
    %v592 = vpop.f32.mrb[0].mxu0
    %593 = vmatprep.mubr.f32.mxu0 0.0
    %594 = vmatmul.mubr.f32.gmra.mrb[0].mxu0 %v514
    %v595 = vpop.f32.mrb[0].mxu0
    %v596 = vadd.f32 0.0, %v595
    %v597 = vpop.f32.mrb[0].mxu0
    %598 = vmatprep.mubr.f32.mxu0 0.0
    %599 = vmatmul.mubr.f32.gmra.mrb[0].mxu0 %v517
    %v600 = vpop.f32.mrb[0].mxu0
    %v601 = vadd.f32 0.0, %v600
    %v602 = vpop.f32.mrb[0].mxu0
    %603 = vdwg.mxu0
    %v604 = vmul.f32 %v586, %v491
    %v605 = vmul.f32 %v591, %v492
    %v606 = vmul.f32 %v596, %v493
    %v607 = vmul.f32 %v601, %v494
    %608 = vrot.lane.b32.xlu0 %v295, 120
    %v609 = vpop.permute.xlu0 %608
    %610 = vrot.lane.b32.xlu0 %v300, 120
    %v611 = vpop.permute.xlu0 %610
    %612 = vrot.lane.b32.xlu0 %v305, 120
    %v613 = vpop.permute.xlu0 %612
    %614 = vrot.lane.b32.xlu0 %v310, 120
    %v615 = vpop.permute.xlu0 %614
    %616 = vrot.lane.b32.xlu0 %v295, 88
    %v617 = vpop.permute.xlu0 %616
    %618 = vrot.lane.b32.xlu0 %v300, 88
    %v619 = vpop.permute.xlu0 %618
    %620 = vrot.lane.b32.xlu0 %v305, 88
    %v621 = vpop.permute.xlu0 %620
    %622 = vrot.lane.b32.xlu0 %v310, 88
    %v623 = vpop.permute.xlu0 %622
    %v624 = vsel %vm345, %v609, 0
    %v626 = vsel %vm345, %v611, 0
    %v628 = vsel %vm345, %v613, 0
    %v630 = vsel %vm345, %v615, 0
    %v632 = vsel %vm345, %v617, 0
    %v634 = vsel %vm345, %v619, 0
    %v636 = vsel %vm345, %v621, 0
    %v638 = vsel %vm345, %v623, 0
    %640 = vmatprep.subr.mxu0 0.0
    %641 = vmatpush1.xpose.msra.mxu0 %v632
    %642 = vmatprep.subr.mxu0 0.0
    %643 = vmatpush1.xpose.msra.mxu0 %v634
    %644 = vmatprep.subr.mxu0 0.0
    %645 = vmatpush1.xpose.msra.mxu0 %v636
    %646 = vmatprep.subr.mxu0 0.0
    %647 = vmatpush1.xpose.msra.mxu0 %v638
    %648 = vmatprep.subr.mxu0 0.0
    %649 = vmatpush1.xpose.msra.mxu0 0.0
    %650 = vmatprep.subr.mxu0 0.0
    %651 = vmatpush1.xpose.msra.mxu0 0.0
    %652 = vmatprep.subr.mxu0 0.0
    %653 = vmatpush1.xpose.msra.mxu0 0.0
    %654 = vmatprep.subr.mxu0 0.0
    %655 = vmatpush1.xpose.msra.mxu0 0.0
    %656 = vmatprep.subr.mxu0 0.0
    %657 = vmatpush1.xpose.msra.mxu0 0.0
    %658 = vmatprep.subr.mxu0 0.0
    %659 = vmatpush1.xpose.msra.mxu0 0.0
    %660 = vmatprep.subr.mxu0 0.0
    %661 = vmatpush1.xpose.msra.mxu0 0.0
    %662 = vmatprep.subr.mxu0 0.0
    %663 = vmatpush1.xpose.msra.mxu0 0.0
    %664 = vmatprep.subr.mxu0 0.0
    %665 = vmatpush1.xpose.msra.mxu0 0.0
    %666 = vmatprep.subr.mxu0 0.0
    %667 = vmatpush1.xpose.msra.mxu0 0.0
    %668 = vmatprep.subr.mxu0 0.0
    %669 = vmatpush1.xpose.msra.mxu0 0.0
    %670 = vmatprep.subr.mxu0 0.0
    %671 = vmatpush1.xpose.msra.mxu0 0.0
    %672 = vmatprep.subr.mxu0 0.0
    %673 = vmatpush1.xpose.msra.mxu0 0.0
    %674 = vmatprep.subr.mxu0 0.0
    %675 = vmatpush1.xpose.msra.mxu0 0.0
    %676 = vmatprep.subr.mxu0 0.0
    %677 = vmatpush1.xpose.msra.mxu0 0.0
    %678 = vmatprep.subr.mxu0 0.0
    %679 = vmatpush1.xpose.msra.mxu0 0.0
    %680 = vmatprep.subr.mxu0 0.0
    %681 = vmatpush1.xpose.msra.mxu0 0.0
    %682 = vmatprep.subr.mxu0 0.0
    %683 = vmatpush1.xpose.msra.mxu0 0.0
    %684 = vmatprep.subr.mxu0 0.0
    %685 = vmatpush1.xpose.msra.mxu0 0.0
    %686 = vmatprep.subr.mxu0 0.0
    %687 = vmatpush1.xpose.msra.mxu0 0.0
    %688 = vmatprep.subr.mxu0 0.0
    %689 = vmatpush1.xpose.msra.mxu0 0.0
    %690 = vmatprep.subr.mxu0 0.0
    %691 = vmatpush1.xpose.msra.mxu0 0.0
    %692 = vmatprep.subr.mxu0 0.0
    %693 = vmatpush1.xpose.msra.mxu0 0.0
    %694 = vmatprep.subr.mxu0 0.0
    %695 = vmatpush1.xpose.msra.mxu0 0.0
    %696 = vmatprep.subr.mxu0 0.0
    %697 = vmatpush1.xpose.msra.mxu0 0.0
    %698 = vmatprep.subr.mxu0 0.0
    %699 = vmatpush1.xpose.msra.mxu0 0.0
    %700 = vmatprep.subr.mxu0 0.0
    %701 = vmatpush1.xpose.msra.mxu0 0.0
    %702 = vmatprep.subr.mxu0 0.0
    %703 = vmatpush1.xpose.msra.mxu0 0.0
    %704 = vmatprep.mubr.f32.mxu0 0.0
    %705 = vmatmul.mubr.f32.gmra.mrb[0].mxu0 %v624
    %v706 = vpop.f32.mrb[0].mxu0
    %v707 = vadd.f32 0.0, %v706
    %v708 = vpop.f32.mrb[0].mxu0
    %709 = vmatprep.mubr.f32.mxu0 0.0
    %710 = vmatmul.mubr.f32.gmra.mrb[0].mxu0 %v626
    %v711 = vpop.f32.mrb[0].mxu0
    %v712 = vadd.f32 0.0, %v711
    %v713 = vpop.f32.mrb[0].mxu0
    %714 = vmatprep.mubr.f32.mxu0 0.0
    %715 = vmatmul.mubr.f32.gmra.mrb[0].mxu0 %v628
    %v716 = vpop.f32.mrb[0].mxu0
    %v717 = vadd.f32 0.0, %v716
    %v718 = vpop.f32.mrb[0].mxu0
    %719 = vmatprep.mubr.f32.mxu0 0.0
    %720 = vmatmul.mubr.f32.gmra.mrb[0].mxu0 %v630
    %v721 = vpop.f32.mrb[0].mxu0
    %v722 = vadd.f32 0.0, %v721
    %v723 = vpop.f32.mrb[0].mxu0
    %724 = vdwg.mxu0
    %v725 = vmul.f32 %v707, 0.35355338
    %v726 = vmul.f32 %v712, 0.35355338
    %v727 = vmul.f32 %v717, 0.35355338
    %v728 = vmul.f32 %v722, 0.35355338
    %v729 = vadd.f32 %v725, %v329
    %v730 = vadd.f32 %v726, %v330
    %v731 = vadd.f32 %v727, %v331
    %v732 = vadd.f32 %v728, %v332
    %v733 = vsel %vm79, %v729, -inf
    %734 = vmax.xlane.f32.xlu0 %v733
    %v735 = vpop.xlane.xlu0 %734
    %v736 = vsel %vm79, %v730, -inf
    %737 = vmax.xlane.f32.xlu0 %v736
    %v738 = vpop.xlane.xlu0 %737
    %v739 = vsel %vm79, %v731, -inf
    %740 = vmax.xlane.f32.xlu0 %v739
    %v741 = vpop.xlane.xlu0 %740
    %v742 = vsel %vm79, %v732, -inf
    %743 = vmax.xlane.f32.xlu0 %v742
    %v744 = vpop.xlane.xlu0 %743
    %v745 = vsub.f32 %v729, %v735
    %v746 = vsub.f32 %v730, %v738
    %v747 = vsub.f32 %v731, %v741
    %v748 = vsub.f32 %v732, %v744
    %v749 = vmul.f32 %v745, 1.442695
    %v750 = vpow.pop %v749
    %v751 = vmul.f32 %v746, 1.442695
    %v752 = vpow.pop %v751
    %v753 = vmul.f32 %v747, 1.442695
    %v754 = vpow.pop %v753
    %v755 = vmul.f32 %v748, 1.442695
    %v756 = vpow.pop %v755
    %v757 = vsel %vm79, %v750, 0.0
    %758 = vadd.xlane.f32.xlu0 %v757
    %v759 = vpop.xlane.xlu0 %758
    %v760 = vsel %vm79, %v752, 0.0
    %761 = vadd.xlane.f32.xlu0 %v760
    %v762 = vpop.xlane.xlu0 %761
    %v763 = vsel %vm79, %v754, 0.0
    %764 = vadd.xlane.f32.xlu0 %v763
    %v765 = vpop.xlane.xlu0 %764
    %v766 = vsel %vm79, %v756, 0.0
    %767 = vadd.xlane.f32.xlu0 %v766
    %v768 = vpop.xlane.xlu0 %767
    %v769 = vrcp.pop %v759
    %v770 = vrcp.pop %v762
    %v771 = vrcp.pop %v765
    %v772 = vrcp.pop %v768
    %773 = vrot.lane.b32.xlu0 %v295, 56
    %v774 = vpop.permute.xlu0 %773
    %775 = vrot.lane.b32.xlu0 %v300, 56
    %v776 = vpop.permute.xlu0 %775
    %777 = vrot.lane.b32.xlu0 %v305, 56
    %v778 = vpop.permute.xlu0 %777
    %779 = vrot.lane.b32.xlu0 %v310, 56
    %v780 = vpop.permute.xlu0 %779
    %v786 = vsel %vm79, %v750, 0
    %v789 = vsel %vm79, %v752, 0
    %v792 = vsel %vm79, %v754, 0
    %v795 = vsel %vm79, %v756, 0
    %797 = vmatprep.subr.mxu0 0.0
    %798 = vmatpush1.msra.mxu0 %v774
    %799 = vmatprep.subr.mxu0 0.0
    %800 = vmatpush1.msra.mxu0 %v776
    %801 = vmatprep.subr.mxu0 0.0
    %802 = vmatpush1.msra.mxu0 %v778
    %803 = vmatprep.subr.mxu0 0.0
    %804 = vmatpush1.msra.mxu0 %v780
    %805 = vmatprep.subr.mxu0 0.0
    %806 = vmatpush1.msra.mxu0 0.0
    %807 = vmatprep.subr.mxu0 0.0
    %808 = vmatpush1.msra.mxu0 0.0
    %809 = vmatprep.subr.mxu0 0.0
    %810 = vmatpush1.msra.mxu0 0.0
    %811 = vmatprep.subr.mxu0 0.0
    %812 = vmatpush1.msra.mxu0 0.0
    %813 = vmatprep.subr.mxu0 0.0
    %814 = vmatpush1.msra.mxu0 0.0
    %815 = vmatprep.subr.mxu0 0.0
    %816 = vmatpush1.msra.mxu0 0.0
    %817 = vmatprep.subr.mxu0 0.0
    %818 = vmatpush1.msra.mxu0 0.0
    %819 = vmatprep.subr.mxu0 0.0
    %820 = vmatpush1.msra.mxu0 0.0
    %821 = vmatprep.subr.mxu0 0.0
    %822 = vmatpush1.msra.mxu0 0.0
    %823 = vmatprep.subr.mxu0 0.0
    %824 = vmatpush1.msra.mxu0 0.0
    %825 = vmatprep.subr.mxu0 0.0
    %826 = vmatpush1.msra.mxu0 0.0
    %827 = vmatprep.subr.mxu0 0.0
    %828 = vmatpush1.msra.mxu0 0.0
    %829 = vmatprep.subr.mxu0 0.0
    %830 = vmatpush1.msra.mxu0 0.0
    %831 = vmatprep.subr.mxu0 0.0
    %832 = vmatpush1.msra.mxu0 0.0
    %833 = vmatprep.subr.mxu0 0.0
    %834 = vmatpush1.msra.mxu0 0.0
    %835 = vmatprep.subr.mxu0 0.0
    %836 = vmatpush1.msra.mxu0 0.0
    %837 = vmatprep.subr.mxu0 0.0
    %838 = vmatpush1.msra.mxu0 0.0
    %839 = vmatprep.subr.mxu0 0.0
    %840 = vmatpush1.msra.mxu0 0.0
    %841 = vmatprep.subr.mxu0 0.0
    %842 = vmatpush1.msra.mxu0 0.0
    %843 = vmatprep.subr.mxu0 0.0
    %844 = vmatpush1.msra.mxu0 0.0
    %845 = vmatprep.subr.mxu0 0.0
    %846 = vmatpush1.msra.mxu0 0.0
    %847 = vmatprep.subr.mxu0 0.0
    %848 = vmatpush1.msra.mxu0 0.0
    %849 = vmatprep.subr.mxu0 0.0
    %850 = vmatpush1.msra.mxu0 0.0
    %851 = vmatprep.subr.mxu0 0.0
    %852 = vmatpush1.msra.mxu0 0.0
    %853 = vmatprep.subr.mxu0 0.0
    %854 = vmatpush1.msra.mxu0 0.0
    %855 = vmatprep.subr.mxu0 0.0
    %856 = vmatpush1.msra.mxu0 0.0
    %857 = vmatprep.subr.mxu0 0.0
    %858 = vmatpush1.msra.mxu0 0.0
    %859 = vmatprep.subr.mxu0 0.0
    %860 = vmatpush1.msra.mxu0 0.0
    %861 = vmatprep.mubr.f32.mxu0 0.0
    %862 = vmatmul.mubr.f32.gmra.mrb[0].mxu0 %v786
    %v863 = vpop.f32.mrb[0].mxu0
    %v864 = vadd.f32 0.0, %v863
    %v865 = vpop.f32.mrb[0].mxu0
    %866 = vmatprep.mubr.f32.mxu0 0.0
    %867 = vmatmul.mubr.f32.gmra.mrb[0].mxu0 %v789
    %v868 = vpop.f32.mrb[0].mxu0
    %v869 = vadd.f32 0.0, %v868
    %v870 = vpop.f32.mrb[0].mxu0
    %871 = vmatprep.mubr.f32.mxu0 0.0
    %872 = vmatmul.mubr.f32.gmra.mrb[0].mxu0 %v792
    %v873 = vpop.f32.mrb[0].mxu0
    %v874 = vadd.f32 0.0, %v873
    %v875 = vpop.f32.mrb[0].mxu0
    %876 = vmatprep.mubr.f32.mxu0 0.0
    %877 = vmatmul.mubr.f32.gmra.mrb[0].mxu0 %v795
    %v878 = vpop.f32.mrb[0].mxu0
    %v879 = vadd.f32 0.0, %v878
    %v880 = vpop.f32.mrb[0].mxu0
    %881 = vdwg.mxu0
    %v882 = vmul.f32 %v864, %v769
    %v883 = vmul.f32 %v869, %v770
    %v884 = vmul.f32 %v874, %v771
    %v885 = vmul.f32 %v879, %v772
    %886 = vrot.lane.b32.xlu0 %v295, 112
    %v887 = vpop.permute.xlu0 %886
    %888 = vrot.lane.b32.xlu0 %v300, 112
    %v889 = vpop.permute.xlu0 %888
    %890 = vrot.lane.b32.xlu0 %v305, 112
    %v891 = vpop.permute.xlu0 %890
    %892 = vrot.lane.b32.xlu0 %v310, 112
    %v893 = vpop.permute.xlu0 %892
    %894 = vrot.lane.b32.xlu0 %v295, 80
    %v895 = vpop.permute.xlu0 %894
    %896 = vrot.lane.b32.xlu0 %v300, 80
    %v897 = vpop.permute.xlu0 %896
    %898 = vrot.lane.b32.xlu0 %v305, 80
    %v899 = vpop.permute.xlu0 %898
    %900 = vrot.lane.b32.xlu0 %v310, 80
    %v901 = vpop.permute.xlu0 %900
    %v902 = vsel %vm345, %v887, 0
    %v904 = vsel %vm345, %v889, 0
    %v906 = vsel %vm345, %v891, 0
    %v908 = vsel %vm345, %v893, 0
    %v910 = vsel %vm345, %v895, 0
    %v912 = vsel %vm345, %v897, 0
    %v914 = vsel %vm345, %v899, 0
    %v916 = vsel %vm345, %v901, 0
    %918 = vmatprep.subr.mxu0 0.0
    %919 = vmatpush1.xpose.msra.mxu0 %v910
    %920 = vmatprep.subr.mxu0 0.0
    %921 = vmatpush1.xpose.msra.mxu0 %v912
    %922 = vmatprep.subr.mxu0 0.0
    %923 = vmatpush1.xpose.msra.mxu0 %v914
    %924 = vmatprep.subr.mxu0 0.0
    %925 = vmatpush1.xpose.msra.mxu0 %v916
    %926 = vmatprep.subr.mxu0 0.0
    %927 = vmatpush1.xpose.msra.mxu0 0.0
    %928 = vmatprep.subr.mxu0 0.0
    %929 = vmatpush1.xpose.msra.mxu0 0.0
    %930 = vmatprep.subr.mxu0 0.0
    %931 = vmatpush1.xpose.msra.mxu0 0.0
    %932 = vmatprep.subr.mxu0 0.0
    %933 = vmatpush1.xpose.msra.mxu0 0.0
    %934 = vmatprep.subr.mxu0 0.0
    %935 = vmatpush1.xpose.msra.mxu0 0.0
    %936 = vmatprep.subr.mxu0 0.0
    %937 = vmatpush1.xpose.msra.mxu0 0.0
    %938 = vmatprep.subr.mxu0 0.0
    %939 = vmatpush1.xpose.msra.mxu0 0.0
    %940 = vmatprep.subr.mxu0 0.0
    %941 = vmatpush1.xpose.msra.mxu0 0.0
    %942 = vmatprep.subr.mxu0 0.0
    %943 = vmatpush1.xpose.msra.mxu0 0.0
    %944 = vmatprep.subr.mxu0 0.0
    %945 = vmatpush1.xpose.msra.mxu0 0.0
    %946 = vmatprep.subr.mxu0 0.0
    %947 = vmatpush1.xpose.msra.mxu0 0.0
    %948 = vmatprep.subr.mxu0 0.0
    %949 = vmatpush1.xpose.msra.mxu0 0.0
    %950 = vmatprep.subr.mxu0 0.0
    %951 = vmatpush1.xpose.msra.mxu0 0.0
    %952 = vmatprep.subr.mxu0 0.0
    %953 = vmatpush1.xpose.msra.mxu0 0.0
    %954 = vmatprep.subr.mxu0 0.0
    %955 = vmatpush1.xpose.msra.mxu0 0.0
    %956 = vmatprep.subr.mxu0 0.0
    %957 = vmatpush1.xpose.msra.mxu0 0.0
    %958 = vmatprep.subr.mxu0 0.0
    %959 = vmatpush1.xpose.msra.mxu0 0.0
    %960 = vmatprep.subr.mxu0 0.0
    %961 = vmatpush1.xpose.msra.mxu0 0.0
    %962 = vmatprep.subr.mxu0 0.0
    %963 = vmatpush1.xpose.msra.mxu0 0.0
    %964 = vmatprep.subr.mxu0 0.0
    %965 = vmatpush1.xpose.msra.mxu0 0.0
    %966 = vmatprep.subr.mxu0 0.0
    %967 = vmatpush1.xpose.msra.mxu0 0.0
    %968 = vmatprep.subr.mxu0 0.0
    %969 = vmatpush1.xpose.msra.mxu0 0.0
    %970 = vmatprep.subr.mxu0 0.0
    %971 = vmatpush1.xpose.msra.mxu0 0.0
    %972 = vmatprep.subr.mxu0 0.0
    %973 = vmatpush1.xpose.msra.mxu0 0.0
    %974 = vmatprep.subr.mxu0 0.0
    %975 = vmatpush1.xpose.msra.mxu0 0.0
    %976 = vmatprep.subr.mxu0 0.0
    %977 = vmatpush1.xpose.msra.mxu0 0.0
    %978 = vmatprep.subr.mxu0 0.0
    %979 = vmatpush1.xpose.msra.mxu0 0.0
    %980 = vmatprep.subr.mxu0 0.0
    %981 = vmatpush1.xpose.msra.mxu0 0.0
    %982 = vmatprep.mubr.f32.mxu0 0.0
    %983 = vmatmul.mubr.f32.gmra.mrb[0].mxu0 %v902
    %v984 = vpop.f32.mrb[0].mxu0
    %v985 = vadd.f32 0.0, %v984
    %v986 = vpop.f32.mrb[0].mxu0
    %987 = vmatprep.mubr.f32.mxu0 0.0
    %988 = vmatmul.mubr.f32.gmra.mrb[0].mxu0 %v904
    %v989 = vpop.f32.mrb[0].mxu0
    %v990 = vadd.f32 0.0, %v989
    %v991 = vpop.f32.mrb[0].mxu0
    %992 = vmatprep.mubr.f32.mxu0 0.0
    %993 = vmatmul.mubr.f32.gmra.mrb[0].mxu0 %v906
    %v994 = vpop.f32.mrb[0].mxu0
    %v995 = vadd.f32 0.0, %v994
    %v996 = vpop.f32.mrb[0].mxu0
    %997 = vmatprep.mubr.f32.mxu0 0.0
    %998 = vmatmul.mubr.f32.gmra.mrb[0].mxu0 %v908
    %v999 = vpop.f32.mrb[0].mxu0
    %v1000 = vadd.f32 0.0, %v999
    %v1001 = vpop.f32.mrb[0].mxu0
    %1002 = vdwg.mxu0
    %v1003 = vmul.f32 %v985, 0.35355338
    %v1004 = vmul.f32 %v990, 0.35355338
    %v1005 = vmul.f32 %v995, 0.35355338
    %v1006 = vmul.f32 %v1000, 0.35355338
    %v1007 = vadd.f32 %v1003, %v329
    %v1008 = vadd.f32 %v1004, %v330
    %v1009 = vadd.f32 %v1005, %v331
    %v1010 = vadd.f32 %v1006, %v332
    %v1011 = vsel %vm79, %v1007, -inf
    %1012 = vmax.xlane.f32.xlu0 %v1011
    %v1013 = vpop.xlane.xlu0 %1012
    %v1014 = vsel %vm79, %v1008, -inf
    %1015 = vmax.xlane.f32.xlu0 %v1014
    %v1016 = vpop.xlane.xlu0 %1015
    %v1017 = vsel %vm79, %v1009, -inf
    %1018 = vmax.xlane.f32.xlu0 %v1017
    %v1019 = vpop.xlane.xlu0 %1018
    %v1020 = vsel %vm79, %v1010, -inf
    %1021 = vmax.xlane.f32.xlu0 %v1020
    %v1022 = vpop.xlane.xlu0 %1021
    %v1023 = vsub.f32 %v1007, %v1013
    %v1024 = vsub.f32 %v1008, %v1016
    %v1025 = vsub.f32 %v1009, %v1019
    %v1026 = vsub.f32 %v1010, %v1022
    %v1027 = vmul.f32 %v1023, 1.442695
    %v1028 = vpow.pop %v1027
    %v1029 = vmul.f32 %v1024, 1.442695
    %v1030 = vpow.pop %v1029
    %v1031 = vmul.f32 %v1025, 1.442695
    %v1032 = vpow.pop %v1031
    %v1033 = vmul.f32 %v1026, 1.442695
    %v1034 = vpow.pop %v1033
    %v1035 = vsel %vm79, %v1028, 0.0
    %1036 = vadd.xlane.f32.xlu0 %v1035
    %v1037 = vpop.xlane.xlu0 %1036
    %v1038 = vsel %vm79, %v1030, 0.0
    %1039 = vadd.xlane.f32.xlu0 %v1038
    %v1040 = vpop.xlane.xlu0 %1039
    %v1041 = vsel %vm79, %v1032, 0.0
    %1042 = vadd.xlane.f32.xlu0 %v1041
    %v1043 = vpop.xlane.xlu0 %1042
    %v1044 = vsel %vm79, %v1034, 0.0
    %1045 = vadd.xlane.f32.xlu0 %v1044
    %v1046 = vpop.xlane.xlu0 %1045
    %v1047 = vrcp.pop %v1037
    %v1048 = vrcp.pop %v1040
    %v1049 = vrcp.pop %v1043
    %v1050 = vrcp.pop %v1046
    %1051 = vrot.lane.b32.xlu0 %v295, 48
    %v1052 = vpop.permute.xlu0 %1051
    %1053 = vrot.lane.b32.xlu0 %v300, 48
    %v1054 = vpop.permute.xlu0 %1053
    %1055 = vrot.lane.b32.xlu0 %v305, 48
    %v1056 = vpop.permute.xlu0 %1055
    %1057 = vrot.lane.b32.xlu0 %v310, 48
    %v1058 = vpop.permute.xlu0 %1057
    %v1064 = vsel %vm79, %v1028, 0
    %v1067 = vsel %vm79, %v1030, 0
    %v1070 = vsel %vm79, %v1032, 0
    %v1073 = vsel %vm79, %v1034, 0
    %1075 = vmatprep.subr.mxu0 0.0
    %1076 = vmatpush1.msra.mxu0 %v1052
    %1077 = vmatprep.subr.mxu0 0.0
    %1078 = vmatpush1.msra.mxu0 %v1054
    %1079 = vmatprep.subr.mxu0 0.0
    %1080 = vmatpush1.msra.mxu0 %v1056
    %1081 = vmatprep.subr.mxu0 0.0
    %1082 = vmatpush1.msra.mxu0 %v1058
    %1083 = vmatprep.subr.mxu0 0.0
    %1084 = vmatpush1.msra.mxu0 0.0
    %1085 = vmatprep.subr.mxu0 0.0
    %1086 = vmatpush1.msra.mxu0 0.0
    %1087 = vmatprep.subr.mxu0 0.0
    %1088 = vmatpush1.msra.mxu0 0.0
    %1089 = vmatprep.subr.mxu0 0.0
    %1090 = vmatpush1.msra.mxu0 0.0
    %1091 = vmatprep.subr.mxu0 0.0
    %1092 = vmatpush1.msra.mxu0 0.0
    %1093 = vmatprep.subr.mxu0 0.0
    %1094 = vmatpush1.msra.mxu0 0.0
    %1095 = vmatprep.subr.mxu0 0.0
    %1096 = vmatpush1.msra.mxu0 0.0
    %1097 = vmatprep.subr.mxu0 0.0
    %1098 = vmatpush1.msra.mxu0 0.0
    %1099 = vmatprep.subr.mxu0 0.0
    %1100 = vmatpush1.msra.mxu0 0.0
    %1101 = vmatprep.subr.mxu0 0.0
    %1102 = vmatpush1.msra.mxu0 0.0
    %1103 = vmatprep.subr.mxu0 0.0
    %1104 = vmatpush1.msra.mxu0 0.0
    %1105 = vmatprep.subr.mxu0 0.0
    %1106 = vmatpush1.msra.mxu0 0.0
    %1107 = vmatprep.subr.mxu0 0.0
    %1108 = vmatpush1.msra.mxu0 0.0
    %1109 = vmatprep.subr.mxu0 0.0
    %1110 = vmatpush1.msra.mxu0 0.0
    %1111 = vmatprep.subr.mxu0 0.0
    %1112 = vmatpush1.msra.mxu0 0.0
    %1113 = vmatprep.subr.mxu0 0.0
    %1114 = vmatpush1.msra.mxu0 0.0
    %1115 = vmatprep.subr.mxu0 0.0
    %1116 = vmatpush1.msra.mxu0 0.0
    %1117 = vmatprep.subr.mxu0 0.0
    %1118 = vmatpush1.msra.mxu0 0.0
    %1119 = vmatprep.subr.mxu0 0.0
    %1120 = vmatpush1.msra.mxu0 0.0
    %1121 = vmatprep.subr.mxu0 0.0
    %1122 = vmatpush1.msra.mxu0 0.0
    %1123 = vmatprep.subr.mxu0 0.0
    %1124 = vmatpush1.msra.mxu0 0.0
    %1125 = vmatprep.subr.mxu0 0.0
    %1126 = vmatpush1.msra.mxu0 0.0
    %1127 = vmatprep.subr.mxu0 0.0
    %1128 = vmatpush1.msra.mxu0 0.0
    %1129 = vmatprep.subr.mxu0 0.0
    %1130 = vmatpush1.msra.mxu0 0.0
    %1131 = vmatprep.subr.mxu0 0.0
    %1132 = vmatpush1.msra.mxu0 0.0
    %1133 = vmatprep.subr.mxu0 0.0
    %1134 = vmatpush1.msra.mxu0 0.0
    %1135 = vmatprep.subr.mxu0 0.0
    %1136 = vmatpush1.msra.mxu0 0.0
    %1137 = vmatprep.subr.mxu0 0.0
    %1138 = vmatpush1.msra.mxu0 0.0
    %1139 = vmatprep.mubr.f32.mxu0 0.0
    %1140 = vmatmul.mubr.f32.gmra.mrb[0].mxu0 %v1064
    %v1141 = vpop.f32.mrb[0].mxu0
    %v1142 = vadd.f32 0.0, %v1141
    %v1143 = vpop.f32.mrb[0].mxu0
    %1144 = vmatprep.mubr.f32.mxu0 0.0
    %1145 = vmatmul.mubr.f32.gmra.mrb[0].mxu0 %v1067
    %v1146 = vpop.f32.mrb[0].mxu0
    %v1147 = vadd.f32 0.0, %v1146
    %v1148 = vpop.f32.mrb[0].mxu0
    %1149 = vmatprep.mubr.f32.mxu0 0.0
    %1150 = vmatmul.mubr.f32.gmra.mrb[0].mxu0 %v1070
    %v1151 = vpop.f32.mrb[0].mxu0
    %v1152 = vadd.f32 0.0, %v1151
    %v1153 = vpop.f32.mrb[0].mxu0
    %1154 = vmatprep.mubr.f32.mxu0 0.0
    %1155 = vmatmul.mubr.f32.gmra.mrb[0].mxu0 %v1073
    %v1156 = vpop.f32.mrb[0].mxu0
    %v1157 = vadd.f32 0.0, %v1156
    %v1158 = vpop.f32.mrb[0].mxu0
    %1159 = vdwg.mxu0
    %v1160 = vmul.f32 %v1142, %v1047
    %v1161 = vmul.f32 %v1147, %v1048
    %v1162 = vmul.f32 %v1152, %v1049
    %v1163 = vmul.f32 %v1157, %v1050
    %1164 = vrot.lane.b32.xlu0 %v295, 104
    %v1165 = vpop.permute.xlu0 %1164
    %1166 = vrot.lane.b32.xlu0 %v300, 104
    %v1167 = vpop.permute.xlu0 %1166
    %1168 = vrot.lane.b32.xlu0 %v305, 104
    %v1169 = vpop.permute.xlu0 %1168
    %1170 = vrot.lane.b32.xlu0 %v310, 104
    %v1171 = vpop.permute.xlu0 %1170
    %1172 = vrot.lane.b32.xlu0 %v295, 72
    %v1173 = vpop.permute.xlu0 %1172
    %1174 = vrot.lane.b32.xlu0 %v300, 72
    %v1175 = vpop.permute.xlu0 %1174
    %1176 = vrot.lane.b32.xlu0 %v305, 72
    %v1177 = vpop.permute.xlu0 %1176
    %1178 = vrot.lane.b32.xlu0 %v310, 72
    %v1179 = vpop.permute.xlu0 %1178
    %v1180 = vsel %vm345, %v1165, 0
    %v1182 = vsel %vm345, %v1167, 0
    %v1184 = vsel %vm345, %v1169, 0
    %v1186 = vsel %vm345, %v1171, 0
    %v1188 = vsel %vm345, %v1173, 0
    %v1190 = vsel %vm345, %v1175, 0
    %v1192 = vsel %vm345, %v1177, 0
    %v1194 = vsel %vm345, %v1179, 0
    %1196 = vmatprep.subr.mxu0 0.0
    %1197 = vmatpush1.xpose.msra.mxu0 %v1188
    %1198 = vmatprep.subr.mxu0 0.0
    %1199 = vmatpush1.xpose.msra.mxu0 %v1190
    %1200 = vmatprep.subr.mxu0 0.0
    %1201 = vmatpush1.xpose.msra.mxu0 %v1192
    %1202 = vmatprep.subr.mxu0 0.0
    %1203 = vmatpush1.xpose.msra.mxu0 %v1194
    %1204 = vmatprep.subr.mxu0 0.0
    %1205 = vmatpush1.xpose.msra.mxu0 0.0
    %1206 = vmatprep.subr.mxu0 0.0
    %1207 = vmatpush1.xpose.msra.mxu0 0.0
    %1208 = vmatprep.subr.mxu0 0.0
    %1209 = vmatpush1.xpose.msra.mxu0 0.0
    %1210 = vmatprep.subr.mxu0 0.0
    %1211 = vmatpush1.xpose.msra.mxu0 0.0
    %1212 = vmatprep.subr.mxu0 0.0
    %1213 = vmatpush1.xpose.msra.mxu0 0.0
    %1214 = vmatprep.subr.mxu0 0.0
    %1215 = vmatpush1.xpose.msra.mxu0 0.0
    %1216 = vmatprep.subr.mxu0 0.0
    %1217 = vmatpush1.xpose.msra.mxu0 0.0
    %1218 = vmatprep.subr.mxu0 0.0
    %1219 = vmatpush1.xpose.msra.mxu0 0.0
    %1220 = vmatprep.subr.mxu0 0.0
    %1221 = vmatpush1.xpose.msra.mxu0 0.0
    %1222 = vmatprep.subr.mxu0 0.0
    %1223 = vmatpush1.xpose.msra.mxu0 0.0
    %1224 = vmatprep.subr.mxu0 0.0
    %1225 = vmatpush1.xpose.msra.mxu0 0.0
    %1226 = vmatprep.subr.mxu0 0.0
    %1227 = vmatpush1.xpose.msra.mxu0 0.0
    %1228 = vmatprep.subr.mxu0 0.0
    %1229 = vmatpush1.xpose.msra.mxu0 0.0
    %1230 = vmatprep.subr.mxu0 0.0
    %1231 = vmatpush1.xpose.msra.mxu0 0.0
    %1232 = vmatprep.subr.mxu0 0.0
    %1233 = vmatpush1.xpose.msra.mxu0 0.0
    %1234 = vmatprep.subr.mxu0 0.0
    %1235 = vmatpush1.xpose.msra.mxu0 0.0
    %1236 = vmatprep.subr.mxu0 0.0
    %1237 = vmatpush1.xpose.msra.mxu0 0.0
    %1238 = vmatprep.subr.mxu0 0.0
    %1239 = vmatpush1.xpose.msra.mxu0 0.0
    %1240 = vmatprep.subr.mxu0 0.0
    %1241 = vmatpush1.xpose.msra.mxu0 0.0
    %1242 = vmatprep.subr.mxu0 0.0
    %1243 = vmatpush1.xpose.msra.mxu0 0.0
    %1244 = vmatprep.subr.mxu0 0.0
    %1245 = vmatpush1.xpose.msra.mxu0 0.0
    %1246 = vmatprep.subr.mxu0 0.0
    %1247 = vmatpush1.xpose.msra.mxu0 0.0
    %1248 = vmatprep.subr.mxu0 0.0
    %1249 = vmatpush1.xpose.msra.mxu0 0.0
    %1250 = vmatprep.subr.mxu0 0.0
    %1251 = vmatpush1.xpose.msra.mxu0 0.0
    %1252 = vmatprep.subr.mxu0 0.0
    %1253 = vmatpush1.xpose.msra.mxu0 0.0
    %1254 = vmatprep.subr.mxu0 0.0
    %1255 = vmatpush1.xpose.msra.mxu0 0.0
    %1256 = vmatprep.subr.mxu0 0.0
    %1257 = vmatpush1.xpose.msra.mxu0 0.0
    %1258 = vmatprep.subr.mxu0 0.0
    %1259 = vmatpush1.xpose.msra.mxu0 0.0
    %1260 = vmatprep.mubr.f32.mxu0 0.0
    %1261 = vmatmul.mubr.f32.gmra.mrb[0].mxu0 %v1180
    %v1262 = vpop.f32.mrb[0].mxu0
    %v1263 = vadd.f32 0.0, %v1262
    %v1264 = vpop.f32.mrb[0].mxu0
    %1265 = vmatprep.mubr.f32.mxu0 0.0
    %1266 = vmatmul.mubr.f32.gmra.mrb[0].mxu0 %v1182
    %v1267 = vpop.f32.mrb[0].mxu0
    %v1268 = vadd.f32 0.0, %v1267
    %v1269 = vpop.f32.mrb[0].mxu0
    %1270 = vmatprep.mubr.f32.mxu0 0.0
    %1271 = vmatmul.mubr.f32.gmra.mrb[0].mxu0 %v1184
    %v1272 = vpop.f32.mrb[0].mxu0
    %v1273 = vadd.f32 0.0, %v1272
    %v1274 = vpop.f32.mrb[0].mxu0
    %1275 = vmatprep.mubr.f32.mxu0 0.0
    %1276 = vmatmul.mubr.f32.gmra.mrb[0].mxu0 %v1186
    %v1277 = vpop.f32.mrb[0].mxu0
    %v1278 = vadd.f32 0.0, %v1277
    %v1279 = vpop.f32.mrb[0].mxu0
    %1280 = vdwg.mxu0
    %v1281 = vmul.f32 %v1263, 0.35355338
    %v1282 = vmul.f32 %v1268, 0.35355338
    %v1283 = vmul.f32 %v1273, 0.35355338
    %v1284 = vmul.f32 %v1278, 0.35355338
    %v1285 = vadd.f32 %v1281, %v329
    %v1286 = vadd.f32 %v1282, %v330
    %v1287 = vadd.f32 %v1283, %v331
    %v1288 = vadd.f32 %v1284, %v332
    %v1289 = vsel %vm79, %v1285, -inf
    %1290 = vmax.xlane.f32.xlu0 %v1289
    %v1291 = vpop.xlane.xlu0 %1290
    %v1292 = vsel %vm79, %v1286, -inf
    %1293 = vmax.xlane.f32.xlu0 %v1292
    %v1294 = vpop.xlane.xlu0 %1293
    %v1295 = vsel %vm79, %v1287, -inf
    %1296 = vmax.xlane.f32.xlu0 %v1295
    %v1297 = vpop.xlane.xlu0 %1296
    %v1298 = vsel %vm79, %v1288, -inf
    %1299 = vmax.xlane.f32.xlu0 %v1298
    %v1300 = vpop.xlane.xlu0 %1299
    %v1301 = vsub.f32 %v1285, %v1291
    %v1302 = vsub.f32 %v1286, %v1294
    %v1303 = vsub.f32 %v1287, %v1297
    %v1304 = vsub.f32 %v1288, %v1300
    %v1305 = vmul.f32 %v1301, 1.442695
    %v1306 = vpow.pop %v1305
    %v1307 = vmul.f32 %v1302, 1.442695
    %v1308 = vpow.pop %v1307
    %v1309 = vmul.f32 %v1303, 1.442695
    %v1310 = vpow.pop %v1309
    %v1311 = vmul.f32 %v1304, 1.442695
    %v1312 = vpow.pop %v1311
    %v1313 = vsel %vm79, %v1306, 0.0
    %1314 = vadd.xlane.f32.xlu0 %v1313
    %v1315 = vpop.xlane.xlu0 %1314
    %v1316 = vsel %vm79, %v1308, 0.0
    %1317 = vadd.xlane.f32.xlu0 %v1316
    %v1318 = vpop.xlane.xlu0 %1317
    %v1319 = vsel %vm79, %v1310, 0.0
    %1320 = vadd.xlane.f32.xlu0 %v1319
    %v1321 = vpop.xlane.xlu0 %1320
    %v1322 = vsel %vm79, %v1312, 0.0
    %1323 = vadd.xlane.f32.xlu0 %v1322
    %v1324 = vpop.xlane.xlu0 %1323
    %v1325 = vrcp.pop %v1315
    %v1326 = vrcp.pop %v1318
    %v1327 = vrcp.pop %v1321
    %v1328 = vrcp.pop %v1324
    %1329 = vrot.lane.b32.xlu0 %v295, 40
    %v1330 = vpop.permute.xlu0 %1329
    %1331 = vrot.lane.b32.xlu0 %v300, 40
    %v1332 = vpop.permute.xlu0 %1331
    %1333 = vrot.lane.b32.xlu0 %v305, 40
    %v1334 = vpop.permute.xlu0 %1333
    %1335 = vrot.lane.b32.xlu0 %v310, 40
    %v1336 = vpop.permute.xlu0 %1335
    %v1342 = vsel %vm79, %v1306, 0
    %v1345 = vsel %vm79, %v1308, 0
    %v1348 = vsel %vm79, %v1310, 0
    %v1351 = vsel %vm79, %v1312, 0
    %1353 = vmatprep.subr.mxu0 0.0
    %1354 = vmatpush1.msra.mxu0 %v1330
    %1355 = vmatprep.subr.mxu0 0.0
    %1356 = vmatpush1.msra.mxu0 %v1332
    %1357 = vmatprep.subr.mxu0 0.0
    %1358 = vmatpush1.msra.mxu0 %v1334
    %1359 = vmatprep.subr.mxu0 0.0
    %1360 = vmatpush1.msra.mxu0 %v1336
    %1361 = vmatprep.subr.mxu0 0.0
    %1362 = vmatpush1.msra.mxu0 0.0
    %1363 = vmatprep.subr.mxu0 0.0
    %1364 = vmatpush1.msra.mxu0 0.0
    %1365 = vmatprep.subr.mxu0 0.0
    %1366 = vmatpush1.msra.mxu0 0.0
    %1367 = vmatprep.subr.mxu0 0.0
    %1368 = vmatpush1.msra.mxu0 0.0
    %1369 = vmatprep.subr.mxu0 0.0
    %1370 = vmatpush1.msra.mxu0 0.0
    %1371 = vmatprep.subr.mxu0 0.0
    %1372 = vmatpush1.msra.mxu0 0.0
    %1373 = vmatprep.subr.mxu0 0.0
    %1374 = vmatpush1.msra.mxu0 0.0
    %1375 = vmatprep.subr.mxu0 0.0
    %1376 = vmatpush1.msra.mxu0 0.0
    %1377 = vmatprep.subr.mxu0 0.0
    %1378 = vmatpush1.msra.mxu0 0.0
    %1379 = vmatprep.subr.mxu0 0.0
    %1380 = vmatpush1.msra.mxu0 0.0
    %1381 = vmatprep.subr.mxu0 0.0
    %1382 = vmatpush1.msra.mxu0 0.0
    %1383 = vmatprep.subr.mxu0 0.0
    %1384 = vmatpush1.msra.mxu0 0.0
    %1385 = vmatprep.subr.mxu0 0.0
    %1386 = vmatpush1.msra.mxu0 0.0
    %1387 = vmatprep.subr.mxu0 0.0
    %1388 = vmatpush1.msra.mxu0 0.0
    %1389 = vmatprep.subr.mxu0 0.0
    %1390 = vmatpush1.msra.mxu0 0.0
    %1391 = vmatprep.subr.mxu0 0.0
    %1392 = vmatpush1.msra.mxu0 0.0
    %1393 = vmatprep.subr.mxu0 0.0
    %1394 = vmatpush1.msra.mxu0 0.0
    %1395 = vmatprep.subr.mxu0 0.0
    %1396 = vmatpush1.msra.mxu0 0.0
    %1397 = vmatprep.subr.mxu0 0.0
    %1398 = vmatpush1.msra.mxu0 0.0
    %1399 = vmatprep.subr.mxu0 0.0
    %1400 = vmatpush1.msra.mxu0 0.0
    %1401 = vmatprep.subr.mxu0 0.0
    %1402 = vmatpush1.msra.mxu0 0.0
    %1403 = vmatprep.subr.mxu0 0.0
    %1404 = vmatpush1.msra.mxu0 0.0
    %1405 = vmatprep.subr.mxu0 0.0
    %1406 = vmatpush1.msra.mxu0 0.0
    %1407 = vmatprep.subr.mxu0 0.0
    %1408 = vmatpush1.msra.mxu0 0.0
    %1409 = vmatprep.subr.mxu0 0.0
    %1410 = vmatpush1.msra.mxu0 0.0
    %1411 = vmatprep.subr.mxu0 0.0
    %1412 = vmatpush1.msra.mxu0 0.0
    %1413 = vmatprep.subr.mxu0 0.0
    %1414 = vmatpush1.msra.mxu0 0.0
    %1415 = vmatprep.subr.mxu0 0.0
    %1416 = vmatpush1.msra.mxu0 0.0
    %1417 = vmatprep.mubr.f32.mxu0 0.0
    %1418 = vmatmul.mubr.f32.gmra.mrb[0].mxu0 %v1342
    %v1419 = vpop.f32.mrb[0].mxu0
    %v1420 = vadd.f32 0.0, %v1419
    %v1421 = vpop.f32.mrb[0].mxu0
    %1422 = vmatprep.mubr.f32.mxu0 0.0
    %1423 = vmatmul.mubr.f32.gmra.mrb[0].mxu0 %v1345
    %v1424 = vpop.f32.mrb[0].mxu0
    %v1425 = vadd.f32 0.0, %v1424
    %v1426 = vpop.f32.mrb[0].mxu0
    %1427 = vmatprep.mubr.f32.mxu0 0.0
    %1428 = vmatmul.mubr.f32.gmra.mrb[0].mxu0 %v1348
    %v1429 = vpop.f32.mrb[0].mxu0
    %v1430 = vadd.f32 0.0, %v1429
    %v1431 = vpop.f32.mrb[0].mxu0
    %1432 = vmatprep.mubr.f32.mxu0 0.0
    %1433 = vmatmul.mubr.f32.gmra.mrb[0].mxu0 %v1351
    %v1434 = vpop.f32.mrb[0].mxu0
    %v1435 = vadd.f32 0.0, %v1434
    %v1436 = vpop.f32.mrb[0].mxu0
    %1437 = vdwg.mxu0
    %v1438 = vmul.f32 %v1420, %v1325
    %v1439 = vmul.f32 %v1425, %v1326
    %v1440 = vmul.f32 %v1430, %v1327
    %v1441 = vmul.f32 %v1435, %v1328
    %1446 = vrot.lane.b32.xlu0 %v882, 8
    %v1447 = vpop.permute.xlu0 %1446
    %1448 = vrot.lane.b32.xlu0 %v883, 8
    %v1449 = vpop.permute.xlu0 %1448
    %1450 = vrot.lane.b32.xlu0 %v884, 8
    %v1451 = vpop.permute.xlu0 %1450
    %1452 = vrot.lane.b32.xlu0 %v885, 8
    %v1453 = vpop.permute.xlu0 %1452
    %1462 = vrot.lane.b32.xlu0 %v1160, 16
    %v1463 = vpop.permute.xlu0 %1462
    %1464 = vrot.lane.b32.xlu0 %v1161, 16
    %v1465 = vpop.permute.xlu0 %1464
    %1466 = vrot.lane.b32.xlu0 %v1162, 16
    %v1467 = vpop.permute.xlu0 %1466
    %1468 = vrot.lane.b32.xlu0 %v1163, 16
    %v1469 = vpop.permute.xlu0 %1468
    %1478 = vrot.lane.b32.xlu0 %v1438, 24
    %v1479 = vpop.permute.xlu0 %1478
    %1480 = vrot.lane.b32.xlu0 %v1439, 24
    %v1481 = vpop.permute.xlu0 %1480
    %1482 = vrot.lane.b32.xlu0 %v1440, 24
    %v1483 = vpop.permute.xlu0 %1482
    %1484 = vrot.lane.b32.xlu0 %v1441, 24
    %v1485 = vpop.permute.xlu0 %1484
    %v1490 = vsel %vm345, %v604, %v1447
    %v1491 = vsel %vm345, %v605, %v1449
    %v1492 = vsel %vm345, %v606, %v1451
    %v1493 = vsel %vm345, %v607, %v1453
    %v1494 = vsel %vm118, %v1490, %v1463
    %v1495 = vsel %vm118, %v1491, %v1465
    %v1496 = vsel %vm118, %v1492, %v1467
    %v1497 = vsel %vm118, %v1493, %v1469
    %vm1498 = vcmask 195584
    %v1499 = vsel %vm1498, %v1494, %v1479
    %v1500 = vsel %vm1498, %v1495, %v1481
    %v1501 = vsel %vm1498, %v1496, %v1483
    %v1502 = vsel %vm1498, %v1497, %v1485
    %v1503 = vlaneseq
    %v1504 = vshrl.u32 %v1503, 7
    %v1505 = vsub.s32 2, %v1504
    %v1506 = vrot.slane %v76, %v1505
    %v1508 = vsel %vm79, %v1499, 0
    %v1511 = vsel %vm79, %v1500, 0
    %v1514 = vsel %vm79, %v1501, 0
    %v1517 = vsel %vm79, %v1502, 0
    %1519 = vmatprep.subr.mxu0 0.0
    %1520 = vmatpush1.msra.mxu0 %v44
    %1521 = vmatprep.subr.mxu0 0.0
    %1522 = vmatpush1.msra.mxu0 %v45
    %1523 = vmatprep.subr.mxu0 0.0
    %1524 = vmatpush1.msra.mxu0 %v46
    %1525 = vmatprep.subr.mxu0 0.0
    %1526 = vmatpush1.msra.mxu0 %v47
    %1527 = vmatprep.subr.mxu0 0.0
    %1528 = vmatpush1.msra.mxu0 0.0
    %1529 = vmatprep.subr.mxu0 0.0
    %1530 = vmatpush1.msra.mxu0 0.0
    %1531 = vmatprep.subr.mxu0 0.0
    %1532 = vmatpush1.msra.mxu0 0.0
    %1533 = vmatprep.subr.mxu0 0.0
    %1534 = vmatpush1.msra.mxu0 0.0
    %1535 = vmatprep.subr.mxu0 0.0
    %1536 = vmatpush1.msra.mxu0 0.0
    %1537 = vmatprep.subr.mxu0 0.0
    %1538 = vmatpush1.msra.mxu0 0.0
    %1539 = vmatprep.subr.mxu0 0.0
    %1540 = vmatpush1.msra.mxu0 0.0
    %1541 = vmatprep.subr.mxu0 0.0
    %1542 = vmatpush1.msra.mxu0 0.0
    %1543 = vmatprep.subr.mxu0 0.0
    %1544 = vmatpush1.msra.mxu0 0.0
    %1545 = vmatprep.subr.mxu0 0.0
    %1546 = vmatpush1.msra.mxu0 0.0
    %1547 = vmatprep.subr.mxu0 0.0
    %1548 = vmatpush1.msra.mxu0 0.0
    %1549 = vmatprep.subr.mxu0 0.0
    %1550 = vmatpush1.msra.mxu0 0.0
    %1551 = vmatprep.subr.mxu0 0.0
    %1552 = vmatpush1.msra.mxu0 0.0
    %1553 = vmatprep.subr.mxu0 0.0
    %1554 = vmatpush1.msra.mxu0 0.0
    %1555 = vmatprep.subr.mxu0 0.0
    %1556 = vmatpush1.msra.mxu0 0.0
    %1557 = vmatprep.subr.mxu0 0.0
    %1558 = vmatpush1.msra.mxu0 0.0
    %1559 = vmatprep.subr.mxu0 0.0
    %1560 = vmatpush1.msra.mxu0 0.0
    %1561 = vmatprep.subr.mxu0 0.0
    %1562 = vmatpush1.msra.mxu0 0.0
    %1563 = vmatprep.subr.mxu0 0.0
    %1564 = vmatpush1.msra.mxu0 0.0
    %1565 = vmatprep.subr.mxu0 0.0
    %1566 = vmatpush1.msra.mxu0 0.0
    %1567 = vmatprep.subr.mxu0 0.0
    %1568 = vmatpush1.msra.mxu0 0.0
    %1569 = vmatprep.subr.mxu0 0.0
    %1570 = vmatpush1.msra.mxu0 0.0
    %1571 = vmatprep.subr.mxu0 0.0
    %1572 = vmatpush1.msra.mxu0 0.0
    %1573 = vmatprep.subr.mxu0 0.0
    %1574 = vmatpush1.msra.mxu0 0.0
    %1575 = vmatprep.subr.mxu0 0.0
    %1576 = vmatpush1.msra.mxu0 0.0
    %1577 = vmatprep.subr.mxu0 0.0
    %1578 = vmatpush1.msra.mxu0 0.0
    %1579 = vmatprep.subr.mxu0 0.0
    %1580 = vmatpush1.msra.mxu0 0.0
    %1581 = vmatprep.subr.mxu0 0.0
    %1582 = vmatpush1.msra.mxu0 0.0
    %1583 = vmatprep.mubr.f32.mxu0 0.0
    %1584 = vmatmul.mubr.f32.gmra.mrb[0].mxu0 %v1508
    %v1585 = vpop.f32.mrb[0].mxu0
    %v1586 = vadd.f32 %v1506, %v1585
    %v1587 = vpop.f32.mrb[0].mxu0
    %1588 = vmatprep.mubr.f32.mxu0 0.0
    %1589 = vmatmul.mubr.f32.gmra.mrb[0].mxu0 %v1511
    %v1590 = vpop.f32.mrb[0].mxu0
    %v1591 = vadd.f32 %v1506, %v1590
    %v1592 = vpop.f32.mrb[0].mxu0
    %1593 = vmatprep.mubr.f32.mxu0 0.0
    %1594 = vmatmul.mubr.f32.gmra.mrb[0].mxu0 %v1514
    %v1595 = vpop.f32.mrb[0].mxu0
    %v1596 = vadd.f32 %v1506, %v1595
    %v1597 = vpop.f32.mrb[0].mxu0
    %1598 = vmatprep.mubr.f32.mxu0 0.0
    %1599 = vmatmul.mubr.f32.gmra.mrb[0].mxu0 %v1517
    %v1600 = vpop.f32.mrb[0].mxu0
    %v1601 = vadd.f32 %v1506, %v1600
    %v1602 = vpop.f32.mrb[0].mxu0
    %1603 = vdwg.mxu0
    %v1604 = vadd.f32 %v194, %v1586
    %v1605 = vadd.f32 %v199, %v1591
    %v1606 = vadd.f32 %v204, %v1596
    %v1607 = vadd.f32 %v209, %v1601
    %v1608 = vsel %vm79, %v1604, 0.0
    %1609 = vadd.xlane.f32.xlu0 %v1608
    %v1610 = vpop.xlane.xlu0 %1609
    %v1611 = vsel %vm79, %v1605, 0.0
    %1612 = vadd.xlane.f32.xlu0 %v1611
    %v1613 = vpop.xlane.xlu0 %1612
    %v1614 = vsel %vm79, %v1606, 0.0
    %1615 = vadd.xlane.f32.xlu0 %v1614
    %v1616 = vpop.xlane.xlu0 %1615
    %v1617 = vsel %vm79, %v1607, 0.0
    %1618 = vadd.xlane.f32.xlu0 %v1617
    %v1619 = vpop.xlane.xlu0 %1618
    %v1620 = vmul.f32 %v1610, %v83
    %v1621 = vmul.f32 %v1613, %v83
    %v1622 = vmul.f32 %v1616, %v83
    %v1623 = vmul.f32 %v1619, %v83
    %v1624 = vsub.f32 %v1604, %v1620
    %v1625 = vsub.f32 %v1605, %v1621
    %v1626 = vsub.f32 %v1606, %v1622
    %v1627 = vsub.f32 %v1607, %v1623
    %v1628 = vmul.f32 %v1624, %v1624
    %v1629 = vmul.f32 %v1625, %v1625
    %v1630 = vmul.f32 %v1626, %v1626
    %v1631 = vmul.f32 %v1627, %v1627
    %v1632 = vsel %vm79, %v1628, 0.0
    %1633 = vadd.xlane.f32.xlu0 %v1632
    %v1634 = vpop.xlane.xlu0 %1633
    %v1635 = vsel %vm79, %v1629, 0.0
    %1636 = vadd.xlane.f32.xlu0 %v1635
    %v1637 = vpop.xlane.xlu0 %1636
    %v1638 = vsel %vm79, %v1630, 0.0
    %1639 = vadd.xlane.f32.xlu0 %v1638
    %v1640 = vpop.xlane.xlu0 %1639
    %v1641 = vsel %vm79, %v1631, 0.0
    %1642 = vadd.xlane.f32.xlu0 %v1641
    %v1643 = vpop.xlane.xlu0 %1642
    %v1644 = vmul.f32 %v1634, %v83
    %v1645 = vmul.f32 %v1637, %v83
    %v1646 = vmul.f32 %v1640, %v83
    %v1647 = vmul.f32 %v1643, %v83
    %v1648 = vadd.f32 %v1644, 1e-05
    %v1649 = vadd.f32 %v1645, 1e-05
    %v1650 = vadd.f32 %v1646, 1e-05
    %v1651 = vadd.f32 %v1647, 1e-05
    %v1652 = vrsqrt.pop %v1648
    %v1653 = vrsqrt.pop %v1649
    %v1654 = vrsqrt.pop %v1650
    %v1655 = vrsqrt.pop %v1651
    %v1656 = vmul.f32 %v1624, %v1652
    %v1657 = vmul.f32 %v1625, %v1653
    %v1658 = vmul.f32 %v1626, %v1654
    %v1659 = vmul.f32 %v1627, %v1655
    %v1660 = vlaneseq
    %v1661 = vshrl.u32 %v1660, 7
    %v1662 = vsub.s32 5, %v1661
    %v1663 = vrot.slane %v76, %v1662
    %v1664 = vmul.f32 %v1656, %v1663
    %v1665 = vmul.f32 %v1657, %v1663
    %v1666 = vmul.f32 %v1658, %v1663
    %v1667 = vmul.f32 %v1659, %v1663
    %v1668 = vlaneseq
    %v1669 = vshrl.u32 %v1668, 7
    %v1670 = vsub.s32 6, %v1669
    %v1671 = vrot.slane %v76, %v1670
    %v1672 = vadd.f32 %v1664, %v1671
    %v1673 = vadd.f32 %v1665, %v1671
    %v1674 = vadd.f32 %v1666, %v1671
    %v1675 = vadd.f32 %v1667, %v1671
    %v1676 = vlaneseq
    %v1677 = vshrl.u32 %v1676, 7
    %v1678 = vsub.s32 3, %v1677
    %v1679 = vrot.slane %v76, %v1678
    %v1681 = vsel %vm79, %v1672, 0
    %v1684 = vsel %vm79, %v1673, 0
    %v1687 = vsel %vm79, %v1674, 0
    %v1690 = vsel %vm79, %v1675, 0
    %1692 = vmatprep.subr.mxu0 0.0
    %1693 = vmatpush1.msra.mxu0 %v48
    %1694 = vmatprep.subr.mxu0 0.0
    %1695 = vmatpush1.msra.mxu0 %v49
    %1696 = vmatprep.subr.mxu0 0.0
    %1697 = vmatpush1.msra.mxu0 %v50
    %1698 = vmatprep.subr.mxu0 0.0
    %1699 = vmatpush1.msra.mxu0 %v51
    %1700 = vmatprep.subr.mxu0 0.0
    %1701 = vmatpush1.msra.mxu0 0.0
    %1702 = vmatprep.subr.mxu0 0.0
    %1703 = vmatpush1.msra.mxu0 0.0
    %1704 = vmatprep.subr.mxu0 0.0
    %1705 = vmatpush1.msra.mxu0 0.0
    %1706 = vmatprep.subr.mxu0 0.0
    %1707 = vmatpush1.msra.mxu0 0.0
    %1708 = vmatprep.subr.mxu0 0.0
    %1709 = vmatpush1.msra.mxu0 0.0
    %1710 = vmatprep.subr.mxu0 0.0
    %1711 = vmatpush1.msra.mxu0 0.0
    %1712 = vmatprep.subr.mxu0 0.0
    %1713 = vmatpush1.msra.mxu0 0.0
    %1714 = vmatprep.subr.mxu0 0.0
    %1715 = vmatpush1.msra.mxu0 0.0
    %1716 = vmatprep.subr.mxu0 0.0
    %1717 = vmatpush1.msra.mxu0 0.0
    %1718 = vmatprep.subr.mxu0 0.0
    %1719 = vmatpush1.msra.mxu0 0.0
    %1720 = vmatprep.subr.mxu0 0.0
    %1721 = vmatpush1.msra.mxu0 0.0
    %1722 = vmatprep.subr.mxu0 0.0
    %1723 = vmatpush1.msra.mxu0 0.0
    %1724 = vmatprep.subr.mxu0 0.0
    %1725 = vmatpush1.msra.mxu0 0.0
    %1726 = vmatprep.subr.mxu0 0.0
    %1727 = vmatpush1.msra.mxu0 0.0
    %1728 = vmatprep.subr.mxu0 0.0
    %1729 = vmatpush1.msra.mxu0 0.0
    %1730 = vmatprep.subr.mxu0 0.0
    %1731 = vmatpush1.msra.mxu0 0.0
    %1732 = vmatprep.subr.mxu0 0.0
    %1733 = vmatpush1.msra.mxu0 0.0
    %1734 = vmatprep.subr.mxu0 0.0
    %1735 = vmatpush1.msra.mxu0 0.0
    %1736 = vmatprep.subr.mxu0 0.0
    %1737 = vmatpush1.msra.mxu0 0.0
    %1738 = vmatprep.subr.mxu0 0.0
    %1739 = vmatpush1.msra.mxu0 0.0
    %1740 = vmatprep.subr.mxu0 0.0
    %1741 = vmatpush1.msra.mxu0 0.0
    %1742 = vmatprep.subr.mxu0 0.0
    %1743 = vmatpush1.msra.mxu0 0.0
    %1744 = vmatprep.subr.mxu0 0.0
    %1745 = vmatpush1.msra.mxu0 0.0
    %1746 = vmatprep.subr.mxu0 0.0
    %1747 = vmatpush1.msra.mxu0 0.0
    %1748 = vmatprep.subr.mxu0 0.0
    %1749 = vmatpush1.msra.mxu0 0.0
    %1750 = vmatprep.subr.mxu0 0.0
    %1751 = vmatpush1.msra.mxu0 0.0
    %1752 = vmatprep.subr.mxu0 0.0
    %1753 = vmatpush1.msra.mxu0 0.0
    %1754 = vmatprep.subr.mxu0 0.0
    %1755 = vmatpush1.msra.mxu0 0.0
    %1756 = vmatprep.mubr.f32.mxu0 0.0
    %1757 = vmatmul.mubr.f32.gmra.mrb[0].mxu0 %v1681
    %v1758 = vpop.f32.mrb[0].mxu0
    %v1759 = vadd.f32 %v1679, %v1758
    %v1760 = vpop.f32.mrb[0].mxu0
    %1761 = vmatprep.mubr.f32.mxu0 0.0
    %1762 = vmatmul.mubr.f32.gmra.mrb[0].mxu0 %v1684
    %v1763 = vpop.f32.mrb[0].mxu0
    %v1764 = vadd.f32 %v1679, %v1763
    %v1765 = vpop.f32.mrb[0].mxu0
    %1766 = vmatprep.mubr.f32.mxu0 0.0
    %1767 = vmatmul.mubr.f32.gmra.mrb[0].mxu0 %v1687
    %v1768 = vpop.f32.mrb[0].mxu0
    %v1769 = vadd.f32 %v1679, %v1768
    %v1770 = vpop.f32.mrb[0].mxu0
    %1771 = vmatprep.mubr.f32.mxu0 0.0
    %1772 = vmatmul.mubr.f32.gmra.mrb[0].mxu0 %v1690
    %v1773 = vpop.f32.mrb[0].mxu0
    %v1774 = vadd.f32 %v1679, %v1773
    %v1775 = vpop.f32.mrb[0].mxu0
    %1776 = vdwg.mxu0
    %v1777 = vmax.f32 %v1759, 0.0
    %v1778 = vmax.f32 %v1764, 0.0
    %v1779 = vmax.f32 %v1769, 0.0
    %v1780 = vmax.f32 %v1774, 0.0
    %v1781 = vlaneseq
    %v1782 = vshrl.u32 %v1781, 7
    %v1783 = vsub.s32 4, %v1782
    %v1784 = vrot.slane %v76, %v1783
    %vm1785 = vcmask 523264
    %v1787 = vsel %vm1785, %v1777, 0
    %v1790 = vsel %vm1785, %v1778, 0
    %v1793 = vsel %vm1785, %v1779, 0
    %v1796 = vsel %vm1785, %v1780, 0
    %1798 = vmatprep.subr.mxu0 0.0
    %1799 = vmatpush1.msra.mxu0 %v52
    %1800 = vmatprep.subr.mxu0 0.0
    %1801 = vmatpush1.msra.mxu0 %v53
    %1802 = vmatprep.subr.mxu0 0.0
    %1803 = vmatpush1.msra.mxu0 %v54
    %1804 = vmatprep.subr.mxu0 0.0
    %1805 = vmatpush1.msra.mxu0 %v55
    %1806 = vmatprep.subr.mxu0 0.0
    %1807 = vmatpush1.msra.mxu0 %v56
    %1808 = vmatprep.subr.mxu0 0.0
    %1809 = vmatpush1.msra.mxu0 %v57
    %1810 = vmatprep.subr.mxu0 0.0
    %1811 = vmatpush1.msra.mxu0 %v58
    %1812 = vmatprep.subr.mxu0 0.0
    %1813 = vmatpush1.msra.mxu0 %v59
    %1814 = vmatprep.subr.mxu0 0.0
    %1815 = vmatpush1.msra.mxu0 0.0
    %1816 = vmatprep.subr.mxu0 0.0
    %1817 = vmatpush1.msra.mxu0 0.0
    %1818 = vmatprep.subr.mxu0 0.0
    %1819 = vmatpush1.msra.mxu0 0.0
    %1820 = vmatprep.subr.mxu0 0.0
    %1821 = vmatpush1.msra.mxu0 0.0
    %1822 = vmatprep.subr.mxu0 0.0
    %1823 = vmatpush1.msra.mxu0 0.0
    %1824 = vmatprep.subr.mxu0 0.0
    %1825 = vmatpush1.msra.mxu0 0.0
    %1826 = vmatprep.subr.mxu0 0.0
    %1827 = vmatpush1.msra.mxu0 0.0
    %1828 = vmatprep.subr.mxu0 0.0
    %1829 = vmatpush1.msra.mxu0 0.0
    %1830 = vmatprep.subr.mxu0 0.0
    %1831 = vmatpush1.msra.mxu0 0.0
    %1832 = vmatprep.subr.mxu0 0.0
    %1833 = vmatpush1.msra.mxu0 0.0
    %1834 = vmatprep.subr.mxu0 0.0
    %1835 = vmatpush1.msra.mxu0 0.0
    %1836 = vmatprep.subr.mxu0 0.0
    %1837 = vmatpush1.msra.mxu0 0.0
    %1838 = vmatprep.subr.mxu0 0.0
    %1839 = vmatpush1.msra.mxu0 0.0
    %1840 = vmatprep.subr.mxu0 0.0
    %1841 = vmatpush1.msra.mxu0 0.0
    %1842 = vmatprep.subr.mxu0 0.0
    %1843 = vmatpush1.msra.mxu0 0.0
    %1844 = vmatprep.subr.mxu0 0.0
    %1845 = vmatpush1.msra.mxu0 0.0
    %1846 = vmatprep.subr.mxu0 0.0
    %1847 = vmatpush1.msra.mxu0 0.0
    %1848 = vmatprep.subr.mxu0 0.0
    %1849 = vmatpush1.msra.mxu0 0.0
    %1850 = vmatprep.subr.mxu0 0.0
    %1851 = vmatpush1.msra.mxu0 0.0
    %1852 = vmatprep.subr.mxu0 0.0
    %1853 = vmatpush1.msra.mxu0 0.0
    %1854 = vmatprep.subr.mxu0 0.0
    %1855 = vmatpush1.msra.mxu0 0.0
    %1856 = vmatprep.subr.mxu0 0.0
    %1857 = vmatpush1.msra.mxu0 0.0
    %1858 = vmatprep.subr.mxu0 0.0
    %1859 = vmatpush1.msra.mxu0 0.0
    %1860 = vmatprep.subr.mxu0 0.0
    %1861 = vmatpush1.msra.mxu0 0.0
    %1862 = vmatprep.mubr.f32.mxu0 0.0
    %1863 = vmatmul.mubr.f32.gmra.mrb[0].mxu0 %v1787
    %v1864 = vpop.f32.mrb[0].mxu0
    %v1865 = vadd.f32 %v1784, %v1864
    %v1866 = vpop.f32.mrb[0].mxu0
    %1867 = vmatprep.mubr.f32.mxu0 0.0
    %1868 = vmatmul.mubr.f32.gmra.mrb[0].mxu0 %v1790
    %v1869 = vpop.f32.mrb[0].mxu0
    %v1870 = vadd.f32 %v1784, %v1869
    %v1871 = vpop.f32.mrb[0].mxu0
    %1872 = vmatprep.mubr.f32.mxu0 0.0
    %1873 = vmatmul.mubr.f32.gmra.mrb[0].mxu0 %v1793
    %v1874 = vpop.f32.mrb[0].mxu0
    %v1875 = vadd.f32 %v1784, %v1874
    %v1876 = vpop.f32.mrb[0].mxu0
    %1877 = vmatprep.mubr.f32.mxu0 0.0
    %1878 = vmatmul.mubr.f32.gmra.mrb[0].mxu0 %v1796
    %v1879 = vpop.f32.mrb[0].mxu0
    %v1880 = vadd.f32 %v1784, %v1879
    %v1881 = vpop.f32.mrb[0].mxu0
    %1882 = vdwg.mxu0
    %v1883 = vadd.f32 %v1672, %v1865
    %v1884 = vadd.f32 %v1673, %v1870
    %v1885 = vadd.f32 %v1674, %v1875
    %v1886 = vadd.f32 %v1675, %v1880
    %v1887 = vsel %vm79, %v1883, 0.0
    %1888 = vadd.xlane.f32.xlu0 %v1887
    %v1889 = vpop.xlane.xlu0 %1888
    %v1890 = vsel %vm79, %v1884, 0.0
    %1891 = vadd.xlane.f32.xlu0 %v1890
    %v1892 = vpop.xlane.xlu0 %1891
    %v1893 = vsel %vm79, %v1885, 0.0
    %1894 = vadd.xlane.f32.xlu0 %v1893
    %v1895 = vpop.xlane.xlu0 %1894
    %v1896 = vsel %vm79, %v1886, 0.0
    %1897 = vadd.xlane.f32.xlu0 %v1896
    %v1898 = vpop.xlane.xlu0 %1897
    %v1899 = vmul.f32 %v1889, %v83
    %v1900 = vmul.f32 %v1892, %v83
    %v1901 = vmul.f32 %v1895, %v83
    %v1902 = vmul.f32 %v1898, %v83
    %v1903 = vsub.f32 %v1883, %v1899
    %v1904 = vsub.f32 %v1884, %v1900
    %v1905 = vsub.f32 %v1885, %v1901
    %v1906 = vsub.f32 %v1886, %v1902
    %v1907 = vmul.f32 %v1903, %v1903
    %v1908 = vmul.f32 %v1904, %v1904
    %v1909 = vmul.f32 %v1905, %v1905
    %v1910 = vmul.f32 %v1906, %v1906
    %v1911 = vsel %vm79, %v1907, 0.0
    %1912 = vadd.xlane.f32.xlu0 %v1911
    %v1913 = vpop.xlane.xlu0 %1912
    %v1914 = vsel %vm79, %v1908, 0.0
    %1915 = vadd.xlane.f32.xlu0 %v1914
    %v1916 = vpop.xlane.xlu0 %1915
    %v1917 = vsel %vm79, %v1909, 0.0
    %1918 = vadd.xlane.f32.xlu0 %v1917
    %v1919 = vpop.xlane.xlu0 %1918
    %v1920 = vsel %vm79, %v1910, 0.0
    %1921 = vadd.xlane.f32.xlu0 %v1920
    %v1922 = vpop.xlane.xlu0 %1921
    %v1923 = vmul.f32 %v1913, %v83
    %v1924 = vmul.f32 %v1916, %v83
    %v1925 = vmul.f32 %v1919, %v83
    %v1926 = vmul.f32 %v1922, %v83
    %v1927 = vadd.f32 %v1923, 1e-05
    %v1928 = vadd.f32 %v1924, 1e-05
    %v1929 = vadd.f32 %v1925, 1e-05
    %v1930 = vadd.f32 %v1926, 1e-05
    %v1931 = vrsqrt.pop %v1927
    %v1932 = vrsqrt.pop %v1928
    %v1933 = vrsqrt.pop %v1929
    %v1934 = vrsqrt.pop %v1930
    %v1935 = vmul.f32 %v1903, %v1931
    %v1936 = vmul.f32 %v1904, %v1932
    %v1937 = vmul.f32 %v1905, %v1933
    %v1938 = vmul.f32 %v1906, %v1934
    %v1939 = vlaneseq
    %v1940 = vshrl.u32 %v1939, 7
    %v1941 = vsub.s32 7, %v1940
    %v1942 = vrot.slane %v76, %v1941
    %v1943 = vmul.f32 %v1935, %v1942
    %v1944 = vmul.f32 %v1936, %v1942
    %v1945 = vmul.f32 %v1937, %v1942
    %v1946 = vmul.f32 %v1938, %v1942
    %v1947 = vlaneseq
    %v1948 = vshrl.u32 %v1947, 7
    %v1949 = vsub.s32 0, %v1948
    %v1950 = vrot.slane %v77, %v1949
    %v1951 = vadd.f32 %v1943, %v1950
    %v1952 = vadd.f32 %v1944, %v1950
    %v1953 = vadd.f32 %v1945, %v1950
    %v1954 = vadd.f32 %v1946, %v1950
    %v1955 = vsel %vm79, %v1951, 0.0
    %1956 = vadd.xlane.f32.xlu0 %v1955
    %v1957 = vpop.xlane.xlu0 %1956
    %v1958 = vsel %vm79, %v1952, 0.0
    %1959 = vadd.xlane.f32.xlu0 %v1958
    %v1960 = vpop.xlane.xlu0 %1959
    %v1961 = vsel %vm79, %v1953, 0.0
    %1962 = vadd.xlane.f32.xlu0 %v1961
    %v1963 = vpop.xlane.xlu0 %1962
    %v1964 = vsel %vm79, %v1954, 0.0
    %1965 = vadd.xlane.f32.xlu0 %v1964
    %v1966 = vpop.xlane.xlu0 %1965
    %v1967 = vmul.f32 %v1957, %v83
    %v1968 = vmul.f32 %v1960, %v83
    %v1969 = vmul.f32 %v1963, %v83
    %v1970 = vmul.f32 %v1966, %v83
    %v1971 = vsub.f32 %v1951, %v1967
    %v1972 = vsub.f32 %v1952, %v1968
    %v1973 = vsub.f32 %v1953, %v1969
    %v1974 = vsub.f32 %v1954, %v1970
    %v1975 = vmul.f32 %v1971, %v1971
    %v1976 = vmul.f32 %v1972, %v1972
    %v1977 = vmul.f32 %v1973, %v1973
    %v1978 = vmul.f32 %v1974, %v1974
    %v1979 = vsel %vm79, %v1975, 0.0
    %1980 = vadd.xlane.f32.xlu0 %v1979
    %v1981 = vpop.xlane.xlu0 %1980
    %v1982 = vsel %vm79, %v1976, 0.0
    %1983 = vadd.xlane.f32.xlu0 %v1982
    %v1984 = vpop.xlane.xlu0 %1983
    %v1985 = vsel %vm79, %v1977, 0.0
    %1986 = vadd.xlane.f32.xlu0 %v1985
    %v1987 = vpop.xlane.xlu0 %1986
    %v1988 = vsel %vm79, %v1978, 0.0
    %1989 = vadd.xlane.f32.xlu0 %v1988
    %v1990 = vpop.xlane.xlu0 %1989
    %v1991 = vmul.f32 %v1981, %v83
    %v1992 = vmul.f32 %v1984, %v83
    %v1993 = vmul.f32 %v1987, %v83
    %v1994 = vmul.f32 %v1990, %v83
    %v1995 = vadd.f32 %v1991, 1e-05
    %v1996 = vadd.f32 %v1992, 1e-05
    %v1997 = vadd.f32 %v1993, 1e-05
    %v1998 = vadd.f32 %v1994, 1e-05
    %v1999 = vrsqrt.pop %v1995
    %v2000 = vrsqrt.pop %v1996
    %v2001 = vrsqrt.pop %v1997
    %v2002 = vrsqrt.pop %v1998
    %v2003 = vmul.f32 %v1971, %v1999
    %v2004 = vmul.f32 %v1972, %v2000
    %v2005 = vmul.f32 %v1973, %v2001
    %v2006 = vmul.f32 %v1974, %v2002
    %v2007 = vlaneseq
    %v2008 = vshrl.u32 %v2007, 7
    %v2009 = vsub.s32 1, %v2008
    %v2010 = vrot.slane %v77, %v2009
    %v2011 = vmul.f32 %v2003, %v2010
    %v2012 = vmul.f32 %v2004, %v2010
    %v2013 = vmul.f32 %v2005, %v2010
    %v2014 = vmul.f32 %v2006, %v2010
    %v2015 = vlaneseq
    %v2016 = vshrl.u32 %v2015, 7
    %v2017 = vsub.s32 2, %v2016
    %v2018 = vrot.slane %v77, %v2017
    %v2019 = vadd.f32 %v2011, %v2018
    %v2020 = vadd.f32 %v2012, %v2018
    %v2021 = vadd.f32 %v2013, %v2018
    %v2022 = vadd.f32 %v2014, %v2018
    %2024 = vrot.lane.b32.xlu0 %v2020, 32
    %v2025 = vpop.permute.xlu0 %2024
    %2028 = vrot.lane.b32.xlu0 %v2021, 64
    %v2029 = vpop.permute.xlu0 %2028
    %2032 = vrot.lane.b32.xlu0 %v2022, 96
    %v2033 = vpop.permute.xlu0 %2032
    %v2035 = vsel %vm79, %v2019, %v2025
    %v2036 = vsel %vm1785, %v2035, %v2029
    %vm2037 = vcmask 785408
    %v2038 = vsel %vm2037, %v2036, %v2033
    %v2039 = vlaneseq
    %v2040 = vshrl.u32 %v2039, 7
    %v2041 = vsub.s32 3, %v2040
    %v2042 = vrot.slane %v77, %v2041
    %2043 = vmatprep.subr.mxu0 0.0
    %2044 = vmatpush1.msra.mxu0 %v60
    %2045 = vmatprep.subr.mxu0 0.0
    %2046 = vmatpush1.msra.mxu0 %v61
    %2047 = vmatprep.subr.mxu0 0.0
    %2048 = vmatpush1.msra.mxu0 %v62
    %2049 = vmatprep.subr.mxu0 0.0
    %2050 = vmatpush1.msra.mxu0 %v63
    %2051 = vmatprep.subr.mxu0 0.0
    %2052 = vmatpush1.msra.mxu0 %v64
    %2053 = vmatprep.subr.mxu0 0.0
    %2054 = vmatpush1.msra.mxu0 %v65
    %2055 = vmatprep.subr.mxu0 0.0
    %2056 = vmatpush1.msra.mxu0 %v66
    %2057 = vmatprep.subr.mxu0 0.0
    %2058 = vmatpush1.msra.mxu0 %v67
    %2059 = vmatprep.subr.mxu0 0.0
    %2060 = vmatpush1.msra.mxu0 %v68
    %2061 = vmatprep.subr.mxu0 0.0
    %2062 = vmatpush1.msra.mxu0 %v69
    %2063 = vmatprep.subr.mxu0 0.0
    %2064 = vmatpush1.msra.mxu0 %v70
    %2065 = vmatprep.subr.mxu0 0.0
    %2066 = vmatpush1.msra.mxu0 %v71
    %2067 = vmatprep.subr.mxu0 0.0
    %2068 = vmatpush1.msra.mxu0 %v72
    %2069 = vmatprep.subr.mxu0 0.0
    %2070 = vmatpush1.msra.mxu0 %v73
    %2071 = vmatprep.subr.mxu0 0.0
    %2072 = vmatpush1.msra.mxu0 %v74
    %2073 = vmatprep.subr.mxu0 0.0
    %2074 = vmatpush1.msra.mxu0 %v75
    %2075 = vmatprep.subr.mxu0 0.0
    %2076 = vmatpush1.msra.mxu0 0.0
    %2077 = vmatprep.subr.mxu0 0.0
    %2078 = vmatpush1.msra.mxu0 0.0
    %2079 = vmatprep.subr.mxu0 0.0
    %2080 = vmatpush1.msra.mxu0 0.0
    %2081 = vmatprep.subr.mxu0 0.0
    %2082 = vmatpush1.msra.mxu0 0.0
    %2083 = vmatprep.subr.mxu0 0.0
    %2084 = vmatpush1.msra.mxu0 0.0
    %2085 = vmatprep.subr.mxu0 0.0
    %2086 = vmatpush1.msra.mxu0 0.0
    %2087 = vmatprep.subr.mxu0 0.0
    %2088 = vmatpush1.msra.mxu0 0.0
    %2089 = vmatprep.subr.mxu0 0.0
    %2090 = vmatpush1.msra.mxu0 0.0
    %2091 = vmatprep.subr.mxu0 0.0
    %2092 = vmatpush1.msra.mxu0 0.0
    %2093 = vmatprep.subr.mxu0 0.0
    %2094 = vmatpush1.msra.mxu0 0.0
    %2095 = vmatprep.subr.mxu0 0.0
    %2096 = vmatpush1.msra.mxu0 0.0
    %2097 = vmatprep.subr.mxu0 0.0
    %2098 = vmatpush1.msra.mxu0 0.0
    %2099 = vmatprep.subr.mxu0 0.0
    %2100 = vmatpush1.msra.mxu0 0.0
    %2101 = vmatprep.subr.mxu0 0.0
    %2102 = vmatpush1.msra.mxu0 0.0
    %2103 = vmatprep.subr.mxu0 0.0
    %2104 = vmatpush1.msra.mxu0 0.0
    %2105 = vmatprep.subr.mxu0 0.0
    %2106 = vmatpush1.msra.mxu0 0.0
    %2107 = vmatprep.mubr.f32.mxu0 0.0
    %2108 = vmatmul.mubr.f32.gmra.mrb[0].mxu0 %v2038
    %v2109 = vpop.f32.mrb[0].mxu0
    %v2110 = vadd.f32 %v2042, %v2109
    %v2111 = vpop.f32.mrb[0].mxu0
    %2112 = vdwg.mxu0
    %v2113 = vmul.f32 %v2110, %v98
    %v2114 = vadd.f32 %v2113, %v84
    %2115 = vst [vmem:[#allocation7] sm:$0xff] %v2114
    // Predicated region
    $region18: #{_forward_jit.1} parent=1 // pred_check
      _
    $region19: #{_forward_jit.1} parent=1 // pred_check_branch
      %2117 = sbr.rel (0) target = $region21
    $region20: #{_forward_jit.1} parent=1 // pred_region
      %s2119 = ssub.s32 128, 128
      %2120 = vsyncadd [#allocation4], %s2119
      %s2122 = sshll.u32 [#allocation7], 4
      %s2123 = int_to_ptr.vmem [resolvable:$true] %s2122
      %2125 = dma.vmem_to_hbm [thread:$0]  %s2123, 128, %s2, [#allocation4]
    $region21: #{_forward_jit.1} parent=1 // pred_fallthru
      _
    // Predicated region
    $region22: #{_forward_jit.1} parent=1 // pred_check
      _
    $region23: #{_forward_jit.1} parent=1 // pred_check_branch
      %2127 = sbr.rel (0) target = $region25
    $region24: #{_forward_jit.1} parent=1 // pred_region
      %2128 = dma.done [#allocation4], 128
    $region25: #{_forward_jit.1} parent=1 // pred_fallthru
      _
    %2129 = vsyncpa [#allocation3], 1
    %2130 = vsyncpa [#allocation6], 1
    %2131 = vsyncpa [#allocation4], 1

</llo_original>
